<compile_context>
chip_gen: v5e
topology: v5e:2x2
jax: 0.10.0
libtpu: 0.0.40
codegen_flags: <defaults>
</compile_context>

<pallas_src>
import functools

import jax
import jax.numpy as jnp
from jax import lax
from jax.experimental import pallas as pl
from jax.experimental.pallas import tpu as pltpu

LANES = 128


def _wire_expval(x, a, b):
    # <Z> of a single qubit after RY(x) then Rot(a, b, c) (c drops out of <Z>).
    return jnp.cos(b) * jnp.cos(x) - jnp.sin(b) * jnp.cos(a) * jnp.sin(x)


def _encoder_kernel(x_ref, c_ref, o_ref, *, B, T, E, H, offs):
    D = E // H
    BT = B * T
    BHT = B * H * T
    tpr = LANES // E              # tokens packed per wide row
    n_wide = (BT * E) // LANES    # wide rows
    f32 = jnp.float32

    def cst(name):
        r, nr, nc = offs[name]    # static Python ints -> zero-cost views
        return c_ref[r:r + nr, 0:nc]

    # ---- single dense (unmasked) load of the activations ----
    x_wide = x_ref[...]                                           # (n_wide, 128)

    # ---- wide -> narrow (canonical token order) via constant placement matmuls ----
    # x[t, e] = x_wide[t // tpr, (t % tpr) * E + e]
    row_place = cst("row_place")                                  # (BT, tpr*n_wide)
    x = None
    for s in range(tpr):
        rp_s = row_place[:, s * n_wide:(s + 1) * n_wide]          # (BT, n_wide)
        xw_s = x_wide[:, s * E:(s + 1) * E]                       # (n_wide, E)
        part = jnp.dot(rp_s, xw_s, preferred_element_type=f32)
        x = part if x is None else x + part                       # (BT, E)

    # ---- LayerNorm over E (no affine, eps=1e-5, biased variance) ----
    mean = jnp.mean(x, axis=-1, keepdims=True)
    xc = x - mean
    var = jnp.mean(xc * xc, axis=-1, keepdims=True)
    xn = xc * lax.rsqrt(var + 1e-5)

    # Single transcendental pass over the whole normalized block.
    cos_x = jnp.cos(xn)
    sin_x = jnp.sin(xn)

    par = cst("params")                                           # (8, E)
    v_cb, v_sca = par[0:1, :], par[1:2, :]
    q_cb, q_sca = par[2:3, :], par[3:4, :]
    k_cb, k_sca = par[4:5, :], par[5:6, :]
    m_cb, m_sca = par[6:7, :], par[7:8, :]

    # Product-state expectation values for ALL heads / batches at once.
    V_all = v_cb * cos_x - v_sca * sin_x                          # (BT, E)
    zq_all = q_cb * cos_x - q_sca * sin_x
    zk_all = k_cb * cos_x - k_sca * sin_x

    # Per-head mean + cos(theta_extra) folded into one constant matmul each.
    proj = cst("proj")                                            # (E, 2H) = [Mq | Mk]
    Q_all = jnp.dot(zq_all, proj[:, :H], preferred_element_type=f32)   # (BT, H)
    K_all = jnp.dot(zk_all, proj[:, H:], preferred_element_type=f32)   # (BT, H)

    # ---- batch-blocked attention: columns l = b'*H*T + h*T + k ----
    rq = cst("rq")                                                # (H,  BHT)
    sel = cst("sel")                                              # (BT, BHT)
    bmask = cst("bmask")                                          # (BT, BHT) same-batch mask
    ones_blk = cst("ones_blk")                                    # (BHT, BHT)
    rep = cst("rep")                                              # (BHT, BT)
    dmask = cst("dmask")                                          # (BHT, E)

    Q_exp = jnp.dot(Q_all, rq, preferred_element_type=f32)        # (BT, BHT): Q_all[t, h(l)]
    K_exp = jnp.dot(K_all, rq, preferred_element_type=f32)
    # K_flat[l] = K_all[b'(l)*T + k(l), h(l)]  (constant-mask select + sublane reduce;
    # an XLU transpose would also work, this keeps only proven-lowering primitives)
    K_flat = jnp.sum(K_exp * sel, axis=0, keepdims=True)          # (1, BHT)

    diff = Q_exp - K_flat
    scale = 1.0 / (D ** 0.5)
    # logits <= 0 and >= -4/sqrt(D) (|Q|,|K| <= 1), so no row-max is needed.
    A = -(diff * diff) * scale
    P = jnp.exp(A) * bmask                                        # cross-batch blocks -> 0
    denom = jnp.dot(P, ones_blk, preferred_element_type=f32) + (1.0 - bmask)
    rec = pl.reciprocal(denom, approx=True)                       # EUP; denom >= ~1.9 (valid) or 1.0
    rec = rec * (2.0 - denom * rec)                               # Newton step 1
    rec = rec * (2.0 - denom * rec)                               # Newton step 2 (1e-4 tol margin)
    Pn = P * rec

    # Block-diagonal V via constant replication matmul: V_blk[l, e] = V_all[row(l), e]*[e//D==h(l)]
    V_blk = jnp.dot(rep, V_all, preferred_element_type=f32) * dmask     # (BHT, E)
    hr = jnp.dot(Pn, V_blk, preferred_element_type=f32)                 # (BT, E) head-concat result

    # Merger expval + residual (residual uses the pre-norm input).
    merged = m_cb * jnp.cos(hr) - m_sca * jnp.sin(hr)
    out = merged + x                                                    # (BT, E)

    # ---- narrow -> wide and single dense (unmasked) store ----
    # out_wide[w, c] = out[w*tpr + c//E, c % E]
    row_sel = cst("row_sel")                                            # (n_wide, tpr*BT)
    place = cst("place")                                                # (tpr*E, 128)
    out_wide = None
    for s in range(tpr):
        rs_s = row_sel[:, s * BT:(s + 1) * BT]                          # (n_wide, BT)
        plc_s = place[s * E:(s + 1) * E, :]                             # (E, 128)
        part = jnp.dot(jnp.dot(rs_s, out, preferred_element_type=f32), plc_s,
                       preferred_element_type=f32)
        out_wide = part if out_wide is None else out_wide + part
    o_ref[...] = out_wide                                               # (n_wide, 128)


def encoder_layer_hybrid1(x, v_theta, q_theta, q_extra, k_theta, k_extra, m_theta):
    B, T, E = x.shape
    H = v_theta.shape[0]
    D = E // H
    f32 = jnp.float32
    BT, HT, BHT = B * T, H * T, B * H * T
    if LANES % E != 0 or (BT * E) % LANES != 0:
        raise ValueError("demo kernel assumes E divides 128 and B*T*E is a multiple of 128")
    tpr = LANES // E
    n_wide = (BT * E) // LANES

    # ---- parameter-only trig preprocessing (O(E), once, in the wrapper) ----
    def cb_sca(theta3):                     # theta3: (3, E) rows [a, b, c]
        a, b = theta3[0], theta3[1]
        return jnp.cos(b), jnp.sin(b) * jnp.cos(a)

    v3 = jnp.transpose(v_theta.astype(f32), (1, 0, 2)).reshape(3, E)
    q3 = jnp.transpose(q_theta.astype(f32), (1, 0, 2)).reshape(3, E)
    k3 = jnp.transpose(k_theta.astype(f32), (1, 0, 2)).reshape(3, E)
    v_cb, v_sca = cb_sca(v3)
    q_cb, q_sca = cb_sca(q3)
    k_cb, k_sca = cb_sca(k3)
    m_cb, m_sca = cb_sca(m_theta.astype(f32))
    params = jnp.stack([v_cb, v_sca, q_cb, q_sca, k_cb, k_sca, m_cb, m_sca], axis=0)  # (8, E)

    # Head-mean projections with cos(theta_extra)/D folded in: Q = zq @ Mq, K = zk @ Mk.
    e_idx = jnp.arange(E)
    h_idx = jnp.arange(H)
    blk = (e_idx[:, None] // D == h_idx[None, :]).astype(f32)                         # (E, H)
    Mq = blk * (jnp.cos(q_extra.astype(f32)) / D)[None, :]
    Mk = blk * (jnp.cos(k_extra.astype(f32)) / D)[None, :]
    proj = jnp.concatenate([Mq, Mk], axis=1)                                          # (E, 2H)

    # ---- structural constants (canonical token order t = b*T + q) ----
    l = jnp.arange(BHT)
    bcol = l // HT
    hcol = (l // T) % H
    kcol = l % T
    rowl = bcol * T + kcol
    t_idx = jnp.arange(BT)
    rq = (h_idx[:, None] == hcol[None, :]).astype(f32)                                # (H, BHT)
    sel = (t_idx[:, None] == rowl[None, :]).astype(f32)                               # (BT, BHT)
    bmask = ((t_idx // T)[:, None] == bcol[None, :]).astype(f32)                      # (BT, BHT)
    ones_blk = ((l[:, None] // T) == (l[None, :] // T)).astype(f32)                   # (BHT, BHT)
    rep = sel.T                                                                       # (BHT, BT)
    dmask = ((e_idx[None, :] // D) == hcol[:, None]).astype(f32)                      # (BHT, E)

    # wide<->narrow placement constants
    w_idx = jnp.arange(n_wide)
    rp_blocks = [(t_idx[:, None] == (w_idx[None, :] * tpr + s)).astype(f32)
                 for s in range(tpr)]                                                 # each (BT, n_wide)
    row_place = jnp.concatenate(rp_blocks, axis=1)                                    # (BT, tpr*n_wide)
    row_sel = jnp.concatenate([b.T for b in rp_blocks], axis=1)                       # (n_wide, tpr*BT)
    c_idx = jnp.arange(LANES)
    place_blocks = [(c_idx[None, :] == (s * E + e_idx[:, None])).astype(f32)
                    for s in range(tpr)]                                              # each (E, 128)
    place = jnp.concatenate(place_blocks, axis=0)                                     # (tpr*E, 128)

    # ---- pack every constant into ONE (rows, 128) VMEM operand (single DMA) ----
    def pack_blocks(named):
        offs = {}
        pieces = []
        r = 0
        for name, arr in named:
            nr, nc = arr.shape
            offs[name] = (r, nr, nc)
            pad_r = (-nr) % 8                     # keep every row offset sublane-aligned
            pieces.append(jnp.pad(arr.astype(f32), ((0, pad_r), (0, LANES - nc))))
            r += nr + pad_r
        return jnp.concatenate(pieces, axis=0), offs, r

    consts, offs, Rtot = pack_blocks([
        ("params", params), ("proj", proj), ("rq", rq), ("sel", sel),
        ("bmask", bmask), ("ones_blk", ones_blk), ("rep", rep), ("dmask", dmask),
        ("row_place", row_place), ("row_sel", row_sel), ("place", place),
    ])

    # ---- lane-dense activation layout: (B*T*E/128, 128) row-major view ----
    x2 = x.astype(f32).reshape(n_wide, LANES)

    kernel = functools.partial(_encoder_kernel, B=B, T=T, E=E, H=H, offs=offs)
    out_wide = pl.pallas_call(
        kernel,
        out_shape=jax.ShapeDtypeStruct((n_wide, LANES), f32),
        grid_spec=pltpu.PrefetchScalarGridSpec(
            num_scalar_prefetch=0,
            grid=(1,),                                        # single step on all generations
            in_specs=[
                pl.BlockSpec((n_wide, LANES), lambda i: (0, 0)),
                pl.BlockSpec((Rtot, LANES), lambda i: (0, 0)),
            ],
            out_specs=pl.BlockSpec((n_wide, LANES), lambda i: (0, 0)),
        ),
        compiler_params=pltpu.CompilerParams(
            dimension_semantics=("arbitrary",)),
    )(x2, consts)
    return out_wide.reshape(B, T, E)


def reference(x, v_theta, q_theta, q_extra, k_theta, k_extra, m_theta):
    """Pure-JAX reference of the same forward pass (for verification)."""
    B, T, E = x.shape
    H = v_theta.shape[0]
    D = E // H
    mean = jnp.mean(x, axis=-1, keepdims=True)
    xc = x - mean
    var = jnp.mean(xc * xc, axis=-1, keepdims=True)
    xn = xc / jnp.sqrt(var + 1e-5)
    outs = []
    for h in range(H):
        xh = xn[..., h * D:(h + 1) * D]
        V = _wire_expval(xh, v_theta[h, 0], v_theta[h, 1])
        zq = _wire_expval(xh, q_theta[h, 0], q_theta[h, 1])
        Q = jnp.cos(q_extra[h]) * jnp.mean(zq, axis=-1)          # (B, T)
        zk = _wire_expval(xh, k_theta[h, 0], k_theta[h, 1])
        K = jnp.cos(k_extra[h]) * jnp.mean(zk, axis=-1)          # (B, T)
        A = -(Q[..., :, None] - K[..., None, :]) ** 2
        P = jax.nn.softmax(A / (D ** 0.5), axis=-1)
        outs.append(jnp.einsum('bij,bjd->bid', P, V))
    hr = jnp.concatenate(outs, axis=-1)
    merged = _wire_expval(hr, m_theta[0], m_theta[1])
    return merged + x


if __name__ == "__main__":
    B, T, E, H = 2, 8, 32, 4     # Token_Dim=T, Embed_Dim=E, head_dimension=H
    D = E // H

    key = jax.random.PRNGKey(0)
    keys = jax.random.split(key, 6)
    x = jax.random.normal(keys[0], (B, T, E), jnp.float32)

    # QLayer parameter shapes from __init__:
    #   per head: V -> [3*D], Q -> [3*D + 1], K -> [3*D + 1]; merger -> [3*E]
    v_theta = jax.random.normal(keys[1], (H, 3 * D), jnp.float32).reshape(H, 3, D)
    q_full = jax.random.normal(keys[2], (H, 3 * D + 1), jnp.float32)
    k_full = jax.random.normal(keys[3], (H, 3 * D + 1), jnp.float32)
    q_theta, q_extra = q_full[:, :3 * D].reshape(H, 3, D), q_full[:, 3 * D]
    k_theta, k_extra = k_full[:, :3 * D].reshape(H, 3, D), k_full[:, 3 * D]
    m_theta = jax.random.normal(keys[4], (3 * E,), jnp.float32).reshape(3, E)

    out = encoder_layer_hybrid1(x, v_theta, q_theta, q_extra, k_theta, k_extra, m_theta)
    out = jax.block_until_ready(out)

    ref = reference(x, v_theta, q_theta, q_extra, k_theta, k_extra, m_theta)
    assert out.shape == (B, T, E), out.shape
    assert jnp.allclose(out, ref, atol=1e-4, rtol=1e-4), float(jnp.max(jnp.abs(out - ref)))
    print("KERNEL_OK")
</pallas_src>

<mosaic_0001>
module attributes {stable_mosaic.version = 11 : i64} {
  func.func @_encoder_kernel(%arg0: i32, %arg1: memref<4x128xf32, #tpu.memory_space<vmem>>, %arg2: memref<424x128xf32, #tpu.memory_space<vmem>>, %arg3: memref<4x128xf32, #tpu.memory_space<vmem>>) attributes {dimension_semantics = [#tpu.dimension_semantics<arbitrary>], iteration_bounds = array<i64: 1>, scalar_prefetch = 0 : i64, scratch_operands = 0 : i64, tpu.core_type = #tpu.core_type<tc>, window_params = [{pipeline_mode = #tpu.pipeline_mode<synchronous>, transform_indices = @transform_0, window_bounds = array<i64: 4, 128>}, {pipeline_mode = #tpu.pipeline_mode<synchronous>, transform_indices = @transform_1, window_bounds = array<i64: 424, 128>}, {pipeline_mode = #tpu.pipeline_mode<synchronous>, transform_indices = @transform_2, window_bounds = array<i64: 4, 128>}]} {
    %c0 = arith.constant 0 : index
    %c0_0 = arith.constant 0 : index
    %0 = vector.load %arg1[%c0, %c0_0] : memref<4x128xf32, #tpu.memory_space<vmem>>, vector<4x128xf32>
    %c272 = arith.constant 272 : index
    %c0_1 = arith.constant 0 : index
    %1 = vector.load %arg2[%c272, %c0_1] : memref<424x128xf32, #tpu.memory_space<vmem>>, vector<16x16xf32>
    %2 = vector.extract_strided_slice %1 {offsets = [0, 0], sizes = [16, 4], strides = [1, 1]} : vector<16x16xf32> to vector<16x4xf32>
    %3 = vector.extract_strided_slice %0 {offsets = [0, 0], sizes = [4, 32], strides = [1, 1]} : vector<4x128xf32> to vector<4x32xf32>
    %cst = arith.constant dense<0.000000e+00> : vector<16x32xf32>
    %4 = tpu.matmul %2, %3, %cst {dimension_numbers = #tpu.dot_dimension_numbers<[1], [0], [0], [1], [0, 0, 1, 1], [], []>} : vector<16x4xf32>, vector<4x32xf32>, vector<16x32xf32> -> vector<16x32xf32>
    %5 = vector.extract_strided_slice %1 {offsets = [0, 4], sizes = [16, 4], strides = [1, 1]} : vector<16x16xf32> to vector<16x4xf32>
    %6 = vector.extract_strided_slice %0 {offsets = [0, 32], sizes = [4, 32], strides = [1, 1]} : vector<4x128xf32> to vector<4x32xf32>
    %cst_2 = arith.constant dense<0.000000e+00> : vector<16x32xf32>
    %7 = tpu.matmul %5, %6, %cst_2 {dimension_numbers = #tpu.dot_dimension_numbers<[1], [0], [0], [1], [0, 0, 1, 1], [], []>} : vector<16x4xf32>, vector<4x32xf32>, vector<16x32xf32> -> vector<16x32xf32>
    %8 = arith.addf %4, %7 : vector<16x32xf32>
    %9 = vector.extract_strided_slice %1 {offsets = [0, 8], sizes = [16, 4], strides = [1, 1]} : vector<16x16xf32> to vector<16x4xf32>
    %10 = vector.extract_strided_slice %0 {offsets = [0, 64], sizes = [4, 32], strides = [1, 1]} : vector<4x128xf32> to vector<4x32xf32>
    %cst_3 = arith.constant dense<0.000000e+00> : vector<16x32xf32>
    %11 = tpu.matmul %9, %10, %cst_3 {dimension_numbers = #tpu.dot_dimension_numbers<[1], [0], [0], [1], [0, 0, 1, 1], [], []>} : vector<16x4xf32>, vector<4x32xf32>, vector<16x32xf32> -> vector<16x32xf32>
    %12 = arith.addf %8, %11 : vector<16x32xf32>
    %13 = vector.extract_strided_slice %1 {offsets = [0, 12], sizes = [16, 4], strides = [1, 1]} : vector<16x16xf32> to vector<16x4xf32>
    %14 = vector.extract_strided_slice %0 {offsets = [0, 96], sizes = [4, 32], strides = [1, 1]} : vector<4x128xf32> to vector<4x32xf32>
    %cst_4 = arith.constant dense<0.000000e+00> : vector<16x32xf32>
    %15 = tpu.matmul %13, %14, %cst_4 {dimension_numbers = #tpu.dot_dimension_numbers<[1], [0], [0], [1], [0, 0, 1, 1], [], []>} : vector<16x4xf32>, vector<4x32xf32>, vector<16x32xf32> -> vector<16x32xf32>
    %16 = arith.addf %12, %15 : vector<16x32xf32>
    %cst_5 = arith.constant dense<0.000000e+00> : vector<16xf32>
    %17 = vector.multi_reduction <add>, %16, %cst_5 [1] : vector<16x32xf32> to vector<16xf32>
    %18 = vector.shape_cast %17 : vector<16xf32> to vector<16x1xf32>
    %cst_6 = arith.constant 3.200000e+01 : f32
    %19 = vector.broadcast %cst_6 : f32 to vector<16x1xf32>
    %20 = arith.divf %18, %19 : vector<16x1xf32>
    %21 = vector.broadcast %20 : vector<16x1xf32> to vector<16x32xf32>
    %22 = arith.subf %16, %21 : vector<16x32xf32>
    %23 = arith.mulf %22, %22 : vector<16x32xf32>
    %cst_7 = arith.constant dense<0.000000e+00> : vector<16xf32>
    %24 = vector.multi_reduction <add>, %23, %cst_7 [1] : vector<16x32xf32> to vector<16xf32>
    %25 = vector.shape_cast %24 : vector<16xf32> to vector<16x1xf32>
    %cst_8 = arith.constant 3.200000e+01 : f32
    %26 = vector.broadcast %cst_8 : f32 to vector<16x1xf32>
    %27 = arith.divf %25, %26 : vector<16x1xf32>
    %cst_9 = arith.constant 9.99999974E-6 : f32
    %28 = vector.broadcast %cst_9 : f32 to vector<16x1xf32>
    %29 = arith.addf %27, %28 : vector<16x1xf32>
    %30 = math.rsqrt %29 : vector<16x1xf32>
    %31 = vector.broadcast %30 : vector<16x1xf32> to vector<16x32xf32>
    %32 = arith.mulf %22, %31 : vector<16x32xf32>
    %33 = math.cos %32 : vector<16x32xf32>
    %34 = math.sin %32 : vector<16x32xf32>
    %c0_10 = arith.constant 0 : index
    %c0_11 = arith.constant 0 : index
    %35 = vector.load %arg2[%c0_10, %c0_11] : memref<424x128xf32, #tpu.memory_space<vmem>>, vector<8x32xf32>
    %36 = vector.extract_strided_slice %35 {offsets = [0, 0], sizes = [1, 32], strides = [1, 1]} : vector<8x32xf32> to vector<1x32xf32>
    %37 = vector.extract_strided_slice %35 {offsets = [1, 0], sizes = [1, 32], strides = [1, 1]} : vector<8x32xf32> to vector<1x32xf32>
    %38 = vector.extract_strided_slice %35 {offsets = [2, 0], sizes = [1, 32], strides = [1, 1]} : vector<8x32xf32> to vector<1x32xf32>
    %39 = vector.extract_strided_slice %35 {offsets = [3, 0], sizes = [1, 32], strides = [1, 1]} : vector<8x32xf32> to vector<1x32xf32>
    %40 = vector.extract_strided_slice %35 {offsets = [4, 0], sizes = [1, 32], strides = [1, 1]} : vector<8x32xf32> to vector<1x32xf32>
    %41 = vector.extract_strided_slice %35 {offsets = [5, 0], sizes = [1, 32], strides = [1, 1]} : vector<8x32xf32> to vector<1x32xf32>
    %42 = vector.extract_strided_slice %35 {offsets = [6, 0], sizes = [1, 32], strides = [1, 1]} : vector<8x32xf32> to vector<1x32xf32>
    %43 = vector.extract_strided_slice %35 {offsets = [7, 0], sizes = [1, 32], strides = [1, 1]} : vector<8x32xf32> to vector<1x32xf32>
    %44 = vector.broadcast %36 : vector<1x32xf32> to vector<16x32xf32>
    %45 = arith.mulf %44, %33 : vector<16x32xf32>
    %46 = vector.broadcast %37 : vector<1x32xf32> to vector<16x32xf32>
    %47 = arith.mulf %46, %34 : vector<16x32xf32>
    %48 = arith.subf %45, %47 : vector<16x32xf32>
    %49 = vector.broadcast %38 : vector<1x32xf32> to vector<16x32xf32>
    %50 = arith.mulf %49, %33 : vector<16x32xf32>
    %51 = vector.broadcast %39 : vector<1x32xf32> to vector<16x32xf32>
    %52 = arith.mulf %51, %34 : vector<16x32xf32>
    %53 = arith.subf %50, %52 : vector<16x32xf32>
    %54 = vector.broadcast %40 : vector<1x32xf32> to vector<16x32xf32>
    %55 = arith.mulf %54, %33 : vector<16x32xf32>
    %56 = vector.broadcast %41 : vector<1x32xf32> to vector<16x32xf32>
    %57 = arith.mulf %56, %34 : vector<16x32xf32>
    %58 = arith.subf %55, %57 : vector<16x32xf32>
    %c8 = arith.constant 8 : index
    %c0_12 = arith.constant 0 : index
    %59 = vector.load %arg2[%c8, %c0_12] : memref<424x128xf32, #tpu.memory_space<vmem>>, vector<32x8xf32>
    %60 = vector.extract_strided_slice %59 {offsets = [0, 0], sizes = [32, 4], strides = [1, 1]} : vector<32x8xf32> to vector<32x4xf32>
    %cst_13 = arith.constant dense<0.000000e+00> : vector<16x4xf32>
    %61 = tpu.matmul %53, %60, %cst_13 {dimension_numbers = #tpu.dot_dimension_numbers<[1], [0], [0], [1], [0, 0, 1, 1], [], []>} : vector<16x32xf32>, vector<32x4xf32>, vector<16x4xf32> -> vector<16x4xf32>
    %62 = vector.extract_strided_slice %59 {offsets = [0, 4], sizes = [32, 4], strides = [1, 1]} : vector<32x8xf32> to vector<32x4xf32>
    %cst_14 = arith.constant dense<0.000000e+00> : vector<16x4xf32>
    %63 = tpu.matmul %58, %62, %cst_14 {dimension_numbers = #tpu.dot_dimension_numbers<[1], [0], [0], [1], [0, 0, 1, 1], [], []>} : vector<16x32xf32>, vector<32x4xf32>, vector<16x4xf32> -> vector<16x4xf32>
    %c40 = arith.constant 40 : index
    %c0_15 = arith.constant 0 : index
    %64 = vector.load %arg2[%c40, %c0_15] : memref<424x128xf32, #tpu.memory_space<vmem>>, vector<4x64xf32>
    %c48 = arith.constant 48 : index
    %c0_16 = arith.constant 0 : index
    %65 = vector.load %arg2[%c48, %c0_16] : memref<424x128xf32, #tpu.memory_space<vmem>>, vector<16x64xf32>
    %c64 = arith.constant 64 : index
    %c0_17 = arith.constant 0 : index
    %66 = vector.load %arg2[%c64, %c0_17] : memref<424x128xf32, #tpu.memory_space<vmem>>, vector<16x64xf32>
    %c80 = arith.constant 80 : index
    %c0_18 = arith.constant 0 : index
    %67 = vector.load %arg2[%c80, %c0_18] : memref<424x128xf32, #tpu.memory_space<vmem>>, vector<64x64xf32>
    %c144 = arith.constant 144 : index
    %c0_19 = arith.constant 0 : index
    %68 = vector.load %arg2[%c144, %c0_19] : memref<424x128xf32, #tpu.memory_space<vmem>>, vector<64x16xf32>
    %c208 = arith.constant 208 : index
    %c0_20 = arith.constant 0 : index
    %69 = vector.load %arg2[%c208, %c0_20] : memref<424x128xf32, #tpu.memory_space<vmem>>, vector<64x32xf32>
    %cst_21 = arith.constant dense<0.000000e+00> : vector<16x64xf32>
    %70 = tpu.matmul %61, %64, %cst_21 {dimension_numbers = #tpu.dot_dimension_numbers<[1], [0], [0], [1], [0, 0, 1, 1], [], []>} : vector<16x4xf32>, vector<4x64xf32>, vector<16x64xf32> -> vector<16x64xf32>
    %cst_22 = arith.constant dense<0.000000e+00> : vector<16x64xf32>
    %71 = tpu.matmul %63, %64, %cst_22 {dimension_numbers = #tpu.dot_dimension_numbers<[1], [0], [0], [1], [0, 0, 1, 1], [], []>} : vector<16x4xf32>, vector<4x64xf32>, vector<16x64xf32> -> vector<16x64xf32>
    %72 = arith.mulf %71, %65 : vector<16x64xf32>
    %cst_23 = arith.constant dense<0.000000e+00> : vector<64xf32>
    %73 = vector.multi_reduction <add>, %72, %cst_23 [0] : vector<16x64xf32> to vector<64xf32>
    %74 = vector.shape_cast %73 : vector<64xf32> to vector<1x64xf32>
    %75 = vector.broadcast %74 : vector<1x64xf32> to vector<16x64xf32>
    %76 = arith.subf %70, %75 : vector<16x64xf32>
    %77 = arith.mulf %76, %76 : vector<16x64xf32>
    %cst_24 = arith.constant 0.000000e+00 : f32
    %78 = vector.broadcast %cst_24 : f32 to vector<16x64xf32>
    %79 = arith.subf %78, %77 : vector<16x64xf32>
    %cst_25 = arith.constant 0.353553385 : f32
    %80 = vector.broadcast %cst_25 : f32 to vector<16x64xf32>
    %81 = arith.mulf %79, %80 : vector<16x64xf32>
    %82 = math.exp %81 : vector<16x64xf32>
    %83 = arith.mulf %82, %66 : vector<16x64xf32>
    %cst_26 = arith.constant dense<0.000000e+00> : vector<16x64xf32>
    %84 = tpu.matmul %83, %67, %cst_26 {dimension_numbers = #tpu.dot_dimension_numbers<[1], [0], [0], [1], [0, 0, 1, 1], [], []>} : vector<16x64xf32>, vector<64x64xf32>, vector<16x64xf32> -> vector<16x64xf32>
    %cst_27 = arith.constant 1.000000e+00 : f32
    %85 = vector.broadcast %cst_27 : f32 to vector<16x64xf32>
    %86 = arith.subf %85, %66 : vector<16x64xf32>
    %87 = arith.addf %84, %86 : vector<16x64xf32>
    %88 = tpu.reciprocal %87 {approx = true} : vector<16x64xf32> -> vector<16x64xf32>
    %89 = arith.mulf %87, %88 : vector<16x64xf32>
    %cst_28 = arith.constant 2.000000e+00 : f32
    %90 = vector.broadcast %cst_28 : f32 to vector<16x64xf32>
    %91 = arith.subf %90, %89 : vector<16x64xf32>
    %92 = arith.mulf %88, %91 : vector<16x64xf32>
    %93 = arith.mulf %87, %92 : vector<16x64xf32>
    %cst_29 = arith.constant 2.000000e+00 : f32
    %94 = vector.broadcast %cst_29 : f32 to vector<16x64xf32>
    %95 = arith.subf %94, %93 : vector<16x64xf32>
    %96 = arith.mulf %92, %95 : vector<16x64xf32>
    %97 = arith.mulf %83, %96 : vector<16x64xf32>
    %cst_30 = arith.constant dense<0.000000e+00> : vector<64x32xf32>
    %98 = tpu.matmul %68, %48, %cst_30 {dimension_numbers = #tpu.dot_dimension_numbers<[1], [0], [0], [1], [0, 0, 1, 1], [], []>} : vector<64x16xf32>, vector<16x32xf32>, vector<64x32xf32> -> vector<64x32xf32>
    %99 = arith.mulf %98, %69 : vector<64x32xf32>
    %cst_31 = arith.constant dense<0.000000e+00> : vector<16x32xf32>
    %100 = tpu.matmul %97, %99, %cst_31 {dimension_numbers = #tpu.dot_dimension_numbers<[1], [0], [0], [1], [0, 0, 1, 1], [], []>} : vector<16x64xf32>, vector<64x32xf32>, vector<16x32xf32> -> vector<16x32xf32>
    %101 = math.cos %100 : vector<16x32xf32>
    %102 = vector.broadcast %42 : vector<1x32xf32> to vector<16x32xf32>
    %103 = arith.mulf %102, %101 : vector<16x32xf32>
    %104 = math.sin %100 : vector<16x32xf32>
    %105 = vector.broadcast %43 : vector<1x32xf32> to vector<16x32xf32>
    %106 = arith.mulf %105, %104 : vector<16x32xf32>
    %107 = arith.subf %103, %106 : vector<16x32xf32>
    %108 = arith.addf %107, %16 : vector<16x32xf32>
    %c288 = arith.constant 288 : index
    %c0_32 = arith.constant 0 : index
    %109 = vector.load %arg2[%c288, %c0_32] : memref<424x128xf32, #tpu.memory_space<vmem>>, vector<4x64xf32>
    %c296 = arith.constant 296 : index
    %c0_33 = arith.constant 0 : index
    %110 = vector.load %arg2[%c296, %c0_33] : memref<424x128xf32, #tpu.memory_space<vmem>>, vector<128x128xf32>
    %111 = vector.extract_strided_slice %109 {offsets = [0, 0], sizes = [4, 16], strides = [1, 1]} : vector<4x64xf32> to vector<4x16xf32>
    %112 = vector.extract_strided_slice %110 {offsets = [0, 0], sizes = [32, 128], strides = [1, 1]} : vector<128x128xf32> to vector<32x128xf32>
    %cst_34 = arith.constant dense<0.000000e+00> : vector<4x32xf32>
    %113 = tpu.matmul %111, %108, %cst_34 {dimension_numbers = #tpu.dot_dimension_numbers<[1], [0], [0], [1], [0, 0, 1, 1], [], []>} : vector<4x16xf32>, vector<16x32xf32>, vector<4x32xf32> -> vector<4x32xf32>
    %cst_35 = arith.constant dense<0.000000e+00> : vector<4x128xf32>
    %114 = tpu.matmul %113, %112, %cst_35 {dimension_numbers = #tpu.dot_dimension_numbers<[1], [0], [0], [1], [0, 0, 1, 1], [], []>} : vector<4x32xf32>, vector<32x128xf32>, vector<4x128xf32> -> vector<4x128xf32>
    %115 = vector.extract_strided_slice %109 {offsets = [0, 16], sizes = [4, 16], strides = [1, 1]} : vector<4x64xf32> to vector<4x16xf32>
    %116 = vector.extract_strided_slice %110 {offsets = [32, 0], sizes = [32, 128], strides = [1, 1]} : vector<128x128xf32> to vector<32x128xf32>
    %cst_36 = arith.constant dense<0.000000e+00> : vector<4x32xf32>
    %117 = tpu.matmul %115, %108, %cst_36 {dimension_numbers = #tpu.dot_dimension_numbers<[1], [0], [0], [1], [0, 0, 1, 1], [], []>} : vector<4x16xf32>, vector<16x32xf32>, vector<4x32xf32> -> vector<4x32xf32>
    %cst_37 = arith.constant dense<0.000000e+00> : vector<4x128xf32>
    %118 = tpu.matmul %117, %116, %cst_37 {dimension_numbers = #tpu.dot_dimension_numbers<[1], [0], [0], [1], [0, 0, 1, 1], [], []>} : vector<4x32xf32>, vector<32x128xf32>, vector<4x128xf32> -> vector<4x128xf32>
    %119 = arith.addf %114, %118 : vector<4x128xf32>
    %120 = vector.extract_strided_slice %109 {offsets = [0, 32], sizes = [4, 16], strides = [1, 1]} : vector<4x64xf32> to vector<4x16xf32>
    %121 = vector.extract_strided_slice %110 {offsets = [64, 0], sizes = [32, 128], strides = [1, 1]} : vector<128x128xf32> to vector<32x128xf32>
    %cst_38 = arith.constant dense<0.000000e+00> : vector<4x32xf32>
    %122 = tpu.matmul %120, %108, %cst_38 {dimension_numbers = #tpu.dot_dimension_numbers<[1], [0], [0], [1], [0, 0, 1, 1], [], []>} : vector<4x16xf32>, vector<16x32xf32>, vector<4x32xf32> -> vector<4x32xf32>
    %cst_39 = arith.constant dense<0.000000e+00> : vector<4x128xf32>
    %123 = tpu.matmul %122, %121, %cst_39 {dimension_numbers = #tpu.dot_dimension_numbers<[1], [0], [0], [1], [0, 0, 1, 1], [], []>} : vector<4x32xf32>, vector<32x128xf32>, vector<4x128xf32> -> vector<4x128xf32>
    %124 = arith.addf %119, %123 : vector<4x128xf32>
    %125 = vector.extract_strided_slice %109 {offsets = [0, 48], sizes = [4, 16], strides = [1, 1]} : vector<4x64xf32> to vector<4x16xf32>
    %126 = vector.extract_strided_slice %110 {offsets = [96, 0], sizes = [32, 128], strides = [1, 1]} : vector<128x128xf32> to vector<32x128xf32>
    %cst_40 = arith.constant dense<0.000000e+00> : vector<4x32xf32>
    %127 = tpu.matmul %125, %108, %cst_40 {dimension_numbers = #tpu.dot_dimension_numbers<[1], [0], [0], [1], [0, 0, 1, 1], [], []>} : vector<4x16xf32>, vector<16x32xf32>, vector<4x32xf32> -> vector<4x32xf32>
    %cst_41 = arith.constant dense<0.000000e+00> : vector<4x128xf32>
    %128 = tpu.matmul %127, %126, %cst_41 {dimension_numbers = #tpu.dot_dimension_numbers<[1], [0], [0], [1], [0, 0, 1, 1], [], []>} : vector<4x32xf32>, vector<32x128xf32>, vector<4x128xf32> -> vector<4x128xf32>
    %129 = arith.addf %124, %128 : vector<4x128xf32>
    %c0_42 = arith.constant 0 : index
    %c0_43 = arith.constant 0 : index
    %130 = vector.load %arg3[%c0_42, %c0_43] : memref<4x128xf32, #tpu.memory_space<vmem>>, vector<4x128xf32>
    tpu.vector_store %arg3[%c0_42, %c0_43], %129 {strides = array<i32>} : memref<4x128xf32, #tpu.memory_space<vmem>>, vector<4x128xf32>,
    return
  }
  func.func @transform_0(%arg0: i32) -> (i32, i32) {
    %c0_i32 = arith.constant 0 : i32
    %c0_i32_0 = arith.constant 0 : i32
    %c0_i32_1 = arith.constant 0 : i32
    return %c0_i32, %c0_i32_0 : i32, i32
  }
  func.func @transform_1(%arg0: i32) -> (i32, i32) {
    %c0_i32 = arith.constant 0 : i32
    %c0_i32_0 = arith.constant 0 : i32
    %c0_i32_1 = arith.constant 0 : i32
    return %c0_i32, %c0_i32_0 : i32, i32
  }
  func.func @transform_2(%arg0: i32) -> (i32, i32) {
    %c0_i32 = arith.constant 0 : i32
    %c0_i32_0 = arith.constant 0 : i32
    %c0_i32_1 = arith.constant 0 : i32
    return %c0_i32, %c0_i32_0 : i32, i32
  }
}

</mosaic_0001>

<llo_original>
// kernel: tpu_custom_call.1
$region0: #{tpu_custom_call.1}
  #allocation0 [shape = 'u32[]', space=smem, size = 0x4, offset = 0x4, fixed_abs, tag = 'smem constant byte address 0x4 - core index']
  #allocation1 [shape = 'u32[72,128]{1,0:T(1,128)}', space=vmem, size = 0x9000, scoped, tag = 'internal scratch']
  %s0 = inlined_call_operand.hbm [shape: f32[4,128], index: 0, kind: input, shape index: {}]
  %s1 = inlined_call_operand.hbm [shape: f32[424,128], index: 1, kind: input, shape index: {}]
  %s2 = inlined_call_operand.hbm [shape: f32[4,128], index: 2, kind: output, shape index: {}]
  %s3 = sld [smem:[#allocation0]]
  $region26: #{tpu_custom_call.1} parent=0
    _
  %s5 = ssub.s32 1, %s3
  %s6 = scalar_select 0, %s5, %s3
  $region1: #{tpu_custom_call.1} parent=0
    #allocation2 [shape = 'u8[2048]{0}', space=vmem, size = 0x800, scoped, tag = 'input window, operand 0, single buffered']
    #allocation3 [shape = 's32[1]{0}', space=sflag, size = 0x4, scoped, tag = 'scoped memory for tpu_custom_call.1']
    #allocation4 [shape = 's32[1]{0}', space=sflag, size = 0x4, scoped, tag = 'scoped memory for tpu_custom_call.1']
    #allocation5 [shape = 'u8[217088]{0}', space=vmem, size = 0x35000, scoped, tag = 'input window, operand 1, single buffered']
    #allocation6 [shape = 's32[1]{0}', space=sflag, size = 0x4, scoped, tag = 'scoped memory for tpu_custom_call.1']
    #allocation7 [shape = 'u8[2048]{0}', space=vmem, size = 0x800, scoped, tag = 'output window, operand 0, single buffered']
    %7 = vsyncpa [#allocation3], 0
    %8 = vsyncpa [#allocation6], 0
    %9 = vsyncpa [#allocation4], 0
    // Predicated region
    $region2: #{tpu_custom_call.1} parent=1 // pred_check
      _
    $region3: #{tpu_custom_call.1} parent=1 // pred_check_branch
      %11 = sbr.rel (0) target = $region5
    $region4: #{tpu_custom_call.1} parent=1 // pred_region
      %13 = vsyncadd [#allocation3], 0
      %s15 = sshll.u32 %s0, 4
      %s16 = int_to_ptr.hbm [resolvable:$true] %s15
      %s17 = sshll.u32 [#allocation2], 4
      %s18 = int_to_ptr.vmem [resolvable:$true] %s17
      %20 = dma.hbm_to_vmem [thread:$0]  %s16, 64, %s18, [#allocation3]
    $region5: #{tpu_custom_call.1} parent=1 // pred_fallthru
      _
    // Predicated region
    $region6: #{tpu_custom_call.1} parent=1 // pred_check
      _
    $region7: #{tpu_custom_call.1} parent=1 // pred_check_branch
      %22 = sbr.rel (0) target = $region9
    $region8: #{tpu_custom_call.1} parent=1 // pred_region
      %24 = vsyncadd [#allocation6], 0
      %s25 = sshll.u32 %s1, 4
      %s26 = int_to_ptr.hbm [resolvable:$true] %s25
      %s27 = sshll.u32 [#allocation5], 4
      %s28 = int_to_ptr.vmem [resolvable:$true] %s27
      %33 = dma.hbm_to_vmem [thread:$0]  %s26, 6784, %s28, [#allocation6], 128, 128, 8
    $region9: #{tpu_custom_call.1} parent=1 // pred_fallthru
      _
    // Predicated region
    $region10: #{tpu_custom_call.1} parent=1 // pred_check
      _
    $region11: #{tpu_custom_call.1} parent=1 // pred_check_branch
      %35 = sbr.rel (0) target = $region13
    $region12: #{tpu_custom_call.1} parent=1 // pred_region
      %37 = dma.done [#allocation3], 64
    $region13: #{tpu_custom_call.1} parent=1 // pred_fallthru
      _
    // Predicated region
    $region14: #{tpu_custom_call.1} parent=1 // pred_check
      _
    $region15: #{tpu_custom_call.1} parent=1 // pred_check_branch
      %39 = sbr.rel (0) target = $region17
    $region16: #{tpu_custom_call.1} parent=1 // pred_region
      %41 = dma.done [#allocation6], 6784
    $region17: #{tpu_custom_call.1} parent=1 // pred_fallthru
      _
    %v42 = vld [vmem:[#allocation2] sm:$0xf]
    %v43 = vld [vmem:[#allocation5 + $0x110] sm:$0xff]
    %v44 = vld [vmem:[#allocation5 + $0x118] sm:$0xff]
    %47 = vrot.lane.b32.xlu0 %v43, 124
    %v48 = vpop.permute.xlu0 %47
    %49 = vrot.lane.b32.xlu0 %v44, 124
    %v50 = vpop.permute.xlu0 %49
    %52 = vrot.lane.b32.xlu0 %v42, 96
    %v53 = vpop.permute.xlu0 %52
    %vm54 = vcmask 31744
    %v55 = vsel %vm54, %v48, 0
    %v57 = vsel %vm54, %v50, 0
    %vm59 = vcmask 1043456
    %v60 = vsel %vm59, %v53, 0
    %62 = vmatpush.msra.mxu0 0.0
    %63 = vmatpush.msra.mxu0 0.0
    %64 = vmatpush.msra.mxu0 0.0
    %65 = vmatpush.msra.mxu0 0.0
    %66 = vmatpush.msra.mxu0 0.0
    %67 = vmatpush.msra.mxu0 0.0
    %68 = vmatpush.msra.mxu0 0.0
    %69 = vmatpush.msra.mxu0 0.0
    %70 = vmatpush.msra.mxu0 0.0
    %71 = vmatpush.msra.mxu0 0.0
    %72 = vmatpush.msra.mxu0 0.0
    %73 = vmatpush.msra.mxu0 0.0
    %74 = vmatpush.msra.mxu0 0.0
    %75 = vmatpush.msra.mxu0 0.0
    %76 = vmatpush.msra.mxu0 0.0
    %77 = vmatpush.msra.mxu0 %v60
    %78 = vmatmul.f32.gmra.mxu0 %v55
    %v79 = vpop.f32.mrf.mxu0
    %v80 = vadd.f32 0.0, %v79
    %81 = vmatmul.f32.gmra.mxu0 %v57
    %v82 = vpop.f32.mrf.mxu0
    %v83 = vadd.f32 0.0, %v82
    %84 = vdwg.mxu0
    %v85 = vsel %vm54, %v43, 0
    %v87 = vsel %vm54, %v44, 0
    %v89 = vsel %vm59, %v42, 0
    %91 = vmatpush.msra.mxu0 0.0
    %92 = vmatpush.msra.mxu0 0.0
    %93 = vmatpush.msra.mxu0 0.0
    %94 = vmatpush.msra.mxu0 0.0
    %95 = vmatpush.msra.mxu0 0.0
    %96 = vmatpush.msra.mxu0 0.0
    %97 = vmatpush.msra.mxu0 0.0
    %98 = vmatpush.msra.mxu0 0.0
    %99 = vmatpush.msra.mxu0 0.0
    %100 = vmatpush.msra.mxu0 0.0
    %101 = vmatpush.msra.mxu0 0.0
    %102 = vmatpush.msra.mxu0 0.0
    %103 = vmatpush.msra.mxu0 0.0
    %104 = vmatpush.msra.mxu0 0.0
    %105 = vmatpush.msra.mxu0 0.0
    %106 = vmatpush.msra.mxu0 %v89
    %107 = vmatmul.f32.gmra.mxu0 %v85
    %v108 = vpop.f32.mrf.mxu0
    %v109 = vadd.f32 %v80, %v108
    %110 = vmatmul.f32.gmra.mxu0 %v87
    %v111 = vpop.f32.mrf.mxu0
    %v112 = vadd.f32 %v83, %v111
    %113 = vdwg.mxu0
    %114 = vrot.lane.b32.xlu0 %v43, 120
    %v115 = vpop.permute.xlu0 %114
    %116 = vrot.lane.b32.xlu0 %v44, 120
    %v117 = vpop.permute.xlu0 %116
    %118 = vrot.lane.b32.xlu0 %v42, 64
    %v119 = vpop.permute.xlu0 %118
    %v120 = vsel %vm54, %v115, 0
    %v122 = vsel %vm54, %v117, 0
    %v124 = vsel %vm59, %v119, 0
    %126 = vmatpush.msra.mxu0 0.0
    %127 = vmatpush.msra.mxu0 0.0
    %128 = vmatpush.msra.mxu0 0.0
    %129 = vmatpush.msra.mxu0 0.0
    %130 = vmatpush.msra.mxu0 0.0
    %131 = vmatpush.msra.mxu0 0.0
    %132 = vmatpush.msra.mxu0 0.0
    %133 = vmatpush.msra.mxu0 0.0
    %134 = vmatpush.msra.mxu0 0.0
    %135 = vmatpush.msra.mxu0 0.0
    %136 = vmatpush.msra.mxu0 0.0
    %137 = vmatpush.msra.mxu0 0.0
    %138 = vmatpush.msra.mxu0 0.0
    %139 = vmatpush.msra.mxu0 0.0
    %140 = vmatpush.msra.mxu0 0.0
    %141 = vmatpush.msra.mxu0 %v124
    %142 = vmatmul.f32.gmra.mxu0 %v120
    %v143 = vpop.f32.mrf.mxu0
    %v144 = vadd.f32 0.0, %v143
    %145 = vmatmul.f32.gmra.mxu0 %v122
    %v146 = vpop.f32.mrf.mxu0
    %v147 = vadd.f32 0.0, %v146
    %148 = vdwg.mxu0
    %v149 = vadd.f32 %v109, %v144
    %v150 = vadd.f32 %v112, %v147
    %151 = vrot.lane.b32.xlu0 %v43, 116
    %v152 = vpop.permute.xlu0 %151
    %153 = vrot.lane.b32.xlu0 %v44, 116
    %v154 = vpop.permute.xlu0 %153
    %155 = vrot.lane.b32.xlu0 %v42, 32
    %v156 = vpop.permute.xlu0 %155
    %v157 = vsel %vm54, %v152, 0
    %v159 = vsel %vm54, %v154, 0
    %v161 = vsel %vm59, %v156, 0
    %163 = vmatpush.msra.mxu0 0.0
    %164 = vmatpush.msra.mxu0 0.0
    %165 = vmatpush.msra.mxu0 0.0
    %166 = vmatpush.msra.mxu0 0.0
    %167 = vmatpush.msra.mxu0 0.0
    %168 = vmatpush.msra.mxu0 0.0
    %169 = vmatpush.msra.mxu0 0.0
    %170 = vmatpush.msra.mxu0 0.0
    %171 = vmatpush.msra.mxu0 0.0
    %172 = vmatpush.msra.mxu0 0.0
    %173 = vmatpush.msra.mxu0 0.0
    %174 = vmatpush.msra.mxu0 0.0
    %175 = vmatpush.msra.mxu0 0.0
    %176 = vmatpush.msra.mxu0 0.0
    %177 = vmatpush.msra.mxu0 0.0
    %178 = vmatpush.msra.mxu0 %v161
    %179 = vmatmul.f32.gmra.mxu0 %v157
    %v180 = vpop.f32.mrf.mxu0
    %v181 = vadd.f32 0.0, %v180
    %182 = vmatmul.f32.gmra.mxu0 %v159
    %v183 = vpop.f32.mrf.mxu0
    %v184 = vadd.f32 0.0, %v183
    %185 = vdwg.mxu0
    %v186 = vadd.f32 %v149, %v181
    %v187 = vadd.f32 %v150, %v184
    %vm188 = vcmask 261120
    %v189 = vsel %vm188, %v186, 0.0
    %190 = vadd.xlane.f32.xlu0 %v189
    %v191 = vpop.xlane.xlu0 %190
    %v192 = vsel %vm188, %v187, 0.0
    %193 = vadd.xlane.f32.xlu0 %v192
    %v194 = vpop.xlane.xlu0 %193
    %v195 = vrcp.pop 32.0
    %v196 = vmul.f32 32.0, %v195
    %v197 = vsub.f32 1.0, %v196
    %v198 = vmul.f32 %v195, %v197
    %v199 = vadd.f32 %v195, %v198
    %vm200 = vweird.f32 %v195
    %v201 = vsel %vm200, %v195, %v199
    %v202 = vmul.f32 %v191, %v201
    %v203 = vmul.f32 %v194, %v201
    %v204 = vsub.f32 %v186, %v202
    %v205 = vsub.f32 %v187, %v203
    %v206 = vmul.f32 %v204, %v204
    %v207 = vmul.f32 %v205, %v205
    %v208 = vsel %vm188, %v206, 0.0
    %209 = vadd.xlane.f32.xlu0 %v208
    %v210 = vpop.xlane.xlu0 %209
    %v211 = vsel %vm188, %v207, 0.0
    %212 = vadd.xlane.f32.xlu0 %v211
    %v213 = vpop.xlane.xlu0 %212
    %v214 = vmul.f32 %v210, %v201
    %v215 = vmul.f32 %v213, %v201
    %v216 = vadd.f32 %v214, 1e-05
    %v217 = vadd.f32 %v215, 1e-05
    %v218 = vrsqrt.pop %v216
    %v219 = vmul.f32 %v218, %v216
    %v220 = vmul.f32 %v219, %v218
    %v221 = vmul.f32 0.5, %v220
    %v222 = vsub.f32 1.5, %v221
    %v223 = vmul.f32 %v218, %v222
    %vm224 = vweird.f32 %v216
    %vm225 = vweird.f32 %v218
    %vm226 = vmor %vm224, %vm225
    %v227 = vsel %vm226, %v218, %v223
    %v228 = vrsqrt.pop %v217
    %v229 = vmul.f32 %v228, %v217
    %v230 = vmul.f32 %v229, %v228
    %v231 = vmul.f32 0.5, %v230
    %v232 = vsub.f32 1.5, %v231
    %v233 = vmul.f32 %v228, %v232
    %vm234 = vweird.f32 %v217
    %vm235 = vweird.f32 %v228
    %vm236 = vmor %vm234, %vm235
    %v237 = vsel %vm236, %v228, %v233
    %v238 = vmul.f32 %v204, %v227
    %v239 = vmul.f32 %v205, %v237
    %v240 = vand.u32 2147483647, %v238
    %vm241 = vcmp.le.f32.partialorder %v240, 0.7853982
    %vm242 = vcmp.lt.s32.totalorder %v238, 0
    %v243 = vand.u32 %v238, 2139095040
    %v244 = vshrl.u32 %v243, 23
    %v245 = vsub.s32 %v244, 127
    %v246 = vand.u32 2147483647, %v238
    %v247 = vand.u32 %v246, 8388607
    %v248 = vor.u32 %v247, 8388608
    %v249 = vsub.s32 0, %v248
    %v250 = vadd.s32 %v245, 1
    %vm251 = vcmp.gt.s32.totalorder %v250, 0
    %v252 = vsel %vm251, %v250, 0
    %v253 = vshrl.u32 %v252, 5
    %v254 = vand.u32 %v252, 31
    %v255 = vsub.s32 32, %v254
    %v256 = vshrl.u32 683565275, %v255
    %v257 = vshll.u32 683565275, %v254
    %v258 = vshrl.u32 2475754826, %v255
    %v259 = vor.u32 %v257, %v258
    %v260 = vshll.u32 2475754826, %v254
    %v261 = vshrl.u32 2131351028, %v255
    %v262 = vor.u32 %v260, %v261
    %v263 = vshll.u32 2131351028, %v254
    %v264 = vshrl.u32 2102212464, %v255
    %v265 = vor.u32 %v263, %v264
    %v266 = vshll.u32 2102212464, %v254
    %v267 = vshrl.u32 920167782, %v255
    %v268 = vor.u32 %v266, %v267
    %v269 = vshll.u32 920167782, %v254
    %v270 = vshrl.u32 1326507024, %v255
    %v271 = vor.u32 %v269, %v270
    %vm272 = vcmp.lt.s32.totalorder %v253, 1
    %vm273 = vcmp.lt.s32.totalorder %v253, 2
    %vm274 = vcmp.lt.s32.totalorder %v253, 3
    %vm275 = vcmp.lt.s32.totalorder %v253, 4
    %v276 = vsel %vm272, %v256, %v259
    %v277 = vsel %vm275, %v265, 2102212464
    %v278 = vsel %vm274, %v262, %v277
    %v279 = vsel %vm273, %v276, %v278
    %v280 = vsel %vm272, %v259, %v262
    %v281 = vsel %vm275, %v268, 920167782
    %v282 = vsel %vm274, %v265, %v281
    %v283 = vsel %vm273, %v280, %v282
    %v284 = vsel %vm272, %v262, %v265
    %v285 = vsel %vm275, %v271, 1326507024
    %v286 = vsel %vm274, %v268, %v285
    %v287 = vsel %vm273, %v284, %v286
    %v288 = vshll.u32 %v248, 8
    %v289 = vand.u32 %v288, 65535
    %v290 = vshrl.u32 %v288, 16
    %v291 = vand.u32 %v287, 65535
    %v292 = vshrl.u32 %v287, 16
    %v293 = vmul.u32 %v289, %v291
    %v294 = vmul.u32 %v289, %v292
    %v295 = vmul.u32 %v290, %v291
    %v296 = vmul.u32 %v290, %v292
    %v297 = vshll.u32 %v294, 16
    %v298 = vshrl.u32 %v294, 16
    %v299 = vshll.u32 %v295, 16
    %v300 = vshrl.u32 %v295, 16
    %vm301 = vc.u32 %v293, %v297
    %v302 = vsel %vm301, 1, 0
    %v303 = vadd.s32 %v293, %v297
    %v304 = vadd.s32 %v296, %v302
    %vm305 = vc.u32 %v303, %v299
    %v306 = vsel %vm305, 1, 0
    %v307 = vadd.s32 %v303, %v299
    %v308 = vadd.s32 %v304, %v306
    %v309 = vadd.s32 %v308, %v298
    %v310 = vadd.s32 %v309, %v300
    %v311 = vand.u32 %v288, 65535
    %v312 = vshrl.u32 %v288, 16
    %v313 = vand.u32 %v283, 65535
    %v314 = vshrl.u32 %v283, 16
    %v315 = vmul.u32 %v311, %v313
    %v316 = vmul.u32 %v311, %v314
    %v317 = vmul.u32 %v312, %v313
    %v318 = vmul.u32 %v312, %v314
    %v319 = vshll.u32 %v316, 16
    %v320 = vshrl.u32 %v316, 16
    %v321 = vshll.u32 %v317, 16
    %v322 = vshrl.u32 %v317, 16
    %vm323 = vc.u32 %v315, %v319
    %v324 = vsel %vm323, 1, 0
    %v325 = vadd.s32 %v315, %v319
    %v326 = vadd.s32 %v318, %v324
    %vm327 = vc.u32 %v325, %v321
    %v328 = vsel %vm327, 1, 0
    %v329 = vadd.s32 %v325, %v321
    %v330 = vadd.s32 %v326, %v328
    %v331 = vadd.s32 %v330, %v320
    %v332 = vadd.s32 %v331, %v322
    %v333 = vmul.u32 %v288, %v279
    %v334 = vadd.s32 %v310, %v329
    %vm335 = vc.u32 %v310, %v329
    %v336 = vadd.s32 %v332, 1
    %v337 = vsel %vm335, %v336, %v332
    %v338 = vadd.s32 %v333, %v337
    %v339 = vadd.s32 %v338, 536870912
    %v340 = vshrl.u32 %v339, 30
    %v341 = vshll.u32 %v340, 30
    %v342 = vsub.s32 %v338, %v341
    %vm343 = vcmp.lt.s32.totalorder %v342, 0
    %v344 = vsub.s32 0, %v342
    %v345 = vsel %vm343, %v344, %v342
    %v346 = vclz %v345
    %v347 = vsub.s32 %v346, 2
    %vm348 = vcmp.gt.s32.totalorder 0, %v347
    %v349 = vsel %vm348, 0, %v347
    %v350 = vsub.s32 32, %v349
    %v351 = vshll.u32 %v342, %v349
    %v352 = vshrl.u32 %v334, %v350
    %v353 = vor.u32 %v351, %v352
    %v354 = vsub.s32 4294967266, %v349
    %v355 = vadd.s32 %v354, 127
    %v356 = vshll.u32 %v355, 23
    %v357 = vor.u32 4788187, %v356
    %v358 = vand.u32 2147483647, %v357
    %v360 = vcvt.s32.f32 %v353
    %v361 = vmul.f32 %v360, %v358
    %v362 = vxor.u32 %v361, 2147483648
    %v363 = vsel %vm242, %v362, %v361
    %v364 = vsub.s32 4, %v340
    %v365 = vsel %vm242, %v364, %v340
    %v366 = vsel %vm241, %v238, %v363
    %v367 = vsel %vm241, 0, %v365
    %v368 = vmul.f32 %v366, %v366
    %v369 = vmul.f32 %v368, -0.001358992
    %v370 = vadd.f32 %v369, 0.041655596
    %v371 = vmul.f32 %v368, %v370
    %v372 = vadd.f32 %v371, -0.4999988
    %v373 = vmul.f32 %v368, %v372
    %v374 = vadd.f32 1.0, %v373
    %v375 = vmul.f32 %v366, %v366
    %v376 = vmul.f32 %v375, -0.00019511016
    %v377 = vadd.f32 %v376, 0.008332121
    %v378 = vmul.f32 %v375, %v377
    %v379 = vadd.f32 %v378, -0.16666654
    %v380 = vmul.f32 %v375, %v379
    %v381 = vadd.f32 %v380, 1.0
    %v382 = vmul.f32 %v381, %v366
    %vm383 = vweird.f32 %v238
    %v384 = vand.u32 %v367, 3
    %vm385 = vcmp.lt.s32.totalorder %v384, 2
    %vm386 = vcmp.eq.s32.totalorder %v384, 0
    %v387 = vxor.u32 %v382, 2147483648
    %v388 = vsel %vm386, %v374, %v387
    %vm389 = vcmp.eq.s32.totalorder %v384, 2
    %v390 = vxor.u32 %v374, 2147483648
    %v391 = vsel %vm389, %v390, %v382
    %v392 = vsel %vm385, %v388, %v391
    %v393 = vsel %vm383, nan, %v392
    %v394 = vand.u32 2147483647, %v239
    %vm395 = vcmp.le.f32.partialorder %v394, 0.7853982
    %vm396 = vcmp.lt.s32.totalorder %v239, 0
    %v397 = vand.u32 %v239, 2139095040
    %v398 = vshrl.u32 %v397, 23
    %v399 = vsub.s32 %v398, 127
    %v400 = vand.u32 2147483647, %v239
    %v401 = vand.u32 %v400, 8388607
    %v402 = vor.u32 %v401, 8388608
    %v403 = vsub.s32 0, %v402
    %v404 = vadd.s32 %v399, 1
    %vm405 = vcmp.gt.s32.totalorder %v404, 0
    %v406 = vsel %vm405, %v404, 0
    %v407 = vshrl.u32 %v406, 5
    %v408 = vand.u32 %v406, 31
    %v409 = vsub.s32 32, %v408
    %v410 = vshrl.u32 683565275, %v409
    %v411 = vshll.u32 683565275, %v408
    %v412 = vshrl.u32 2475754826, %v409
    %v413 = vor.u32 %v411, %v412
    %v414 = vshll.u32 2475754826, %v408
    %v415 = vshrl.u32 2131351028, %v409
    %v416 = vor.u32 %v414, %v415
    %v417 = vshll.u32 2131351028, %v408
    %v418 = vshrl.u32 2102212464, %v409
    %v419 = vor.u32 %v417, %v418
    %v420 = vshll.u32 2102212464, %v408
    %v421 = vshrl.u32 920167782, %v409
    %v422 = vor.u32 %v420, %v421
    %v423 = vshll.u32 920167782, %v408
    %v424 = vshrl.u32 1326507024, %v409
    %v425 = vor.u32 %v423, %v424
    %vm426 = vcmp.lt.s32.totalorder %v407, 1
    %vm427 = vcmp.lt.s32.totalorder %v407, 2
    %vm428 = vcmp.lt.s32.totalorder %v407, 3
    %vm429 = vcmp.lt.s32.totalorder %v407, 4
    %v430 = vsel %vm426, %v410, %v413
    %v431 = vsel %vm429, %v419, 2102212464
    %v432 = vsel %vm428, %v416, %v431
    %v433 = vsel %vm427, %v430, %v432
    %v434 = vsel %vm426, %v413, %v416
    %v435 = vsel %vm429, %v422, 920167782
    %v436 = vsel %vm428, %v419, %v435
    %v437 = vsel %vm427, %v434, %v436
    %v438 = vsel %vm426, %v416, %v419
    %v439 = vsel %vm429, %v425, 1326507024
    %v440 = vsel %vm428, %v422, %v439
    %v441 = vsel %vm427, %v438, %v440
    %v442 = vshll.u32 %v402, 8
    %v443 = vand.u32 %v442, 65535
    %v444 = vshrl.u32 %v442, 16
    %v445 = vand.u32 %v441, 65535
    %v446 = vshrl.u32 %v441, 16
    %v447 = vmul.u32 %v443, %v445
    %v448 = vmul.u32 %v443, %v446
    %v449 = vmul.u32 %v444, %v445
    %v450 = vmul.u32 %v444, %v446
    %v451 = vshll.u32 %v448, 16
    %v452 = vshrl.u32 %v448, 16
    %v453 = vshll.u32 %v449, 16
    %v454 = vshrl.u32 %v449, 16
    %vm455 = vc.u32 %v447, %v451
    %v456 = vsel %vm455, 1, 0
    %v457 = vadd.s32 %v447, %v451
    %v458 = vadd.s32 %v450, %v456
    %vm459 = vc.u32 %v457, %v453
    %v460 = vsel %vm459, 1, 0
    %v461 = vadd.s32 %v457, %v453
    %v462 = vadd.s32 %v458, %v460
    %v463 = vadd.s32 %v462, %v452
    %v464 = vadd.s32 %v463, %v454
    %v465 = vand.u32 %v442, 65535
    %v466 = vshrl.u32 %v442, 16
    %v467 = vand.u32 %v437, 65535
    %v468 = vshrl.u32 %v437, 16
    %v469 = vmul.u32 %v465, %v467
    %v470 = vmul.u32 %v465, %v468
    %v471 = vmul.u32 %v466, %v467
    %v472 = vmul.u32 %v466, %v468
    %v473 = vshll.u32 %v470, 16
    %v474 = vshrl.u32 %v470, 16
    %v475 = vshll.u32 %v471, 16
    %v476 = vshrl.u32 %v471, 16
    %vm477 = vc.u32 %v469, %v473
    %v478 = vsel %vm477, 1, 0
    %v479 = vadd.s32 %v469, %v473
    %v480 = vadd.s32 %v472, %v478
    %vm481 = vc.u32 %v479, %v475
    %v482 = vsel %vm481, 1, 0
    %v483 = vadd.s32 %v479, %v475
    %v484 = vadd.s32 %v480, %v482
    %v485 = vadd.s32 %v484, %v474
    %v486 = vadd.s32 %v485, %v476
    %v487 = vmul.u32 %v442, %v433
    %v488 = vadd.s32 %v464, %v483
    %vm489 = vc.u32 %v464, %v483
    %v490 = vadd.s32 %v486, 1
    %v491 = vsel %vm489, %v490, %v486
    %v492 = vadd.s32 %v487, %v491
    %v493 = vadd.s32 %v492, 536870912
    %v494 = vshrl.u32 %v493, 30
    %v495 = vshll.u32 %v494, 30
    %v496 = vsub.s32 %v492, %v495
    %vm497 = vcmp.lt.s32.totalorder %v496, 0
    %v498 = vsub.s32 0, %v496
    %v499 = vsel %vm497, %v498, %v496
    %v500 = vclz %v499
    %v501 = vsub.s32 %v500, 2
    %vm502 = vcmp.gt.s32.totalorder 0, %v501
    %v503 = vsel %vm502, 0, %v501
    %v504 = vsub.s32 32, %v503
    %v505 = vshll.u32 %v496, %v503
    %v506 = vshrl.u32 %v488, %v504
    %v507 = vor.u32 %v505, %v506
    %v508 = vsub.s32 4294967266, %v503
    %v509 = vadd.s32 %v508, 127
    %v510 = vshll.u32 %v509, 23
    %v511 = vor.u32 4788187, %v510
    %v512 = vand.u32 2147483647, %v511
    %v514 = vcvt.s32.f32 %v507
    %v515 = vmul.f32 %v514, %v512
    %v516 = vxor.u32 %v515, 2147483648
    %v517 = vsel %vm396, %v516, %v515
    %v518 = vsub.s32 4, %v494
    %v519 = vsel %vm396, %v518, %v494
    %v520 = vsel %vm395, %v239, %v517
    %v521 = vsel %vm395, 0, %v519
    %v522 = vmul.f32 %v520, %v520
    %v523 = vmul.f32 %v522, -0.001358992
    %v524 = vadd.f32 %v523, 0.041655596
    %v525 = vmul.f32 %v522, %v524
    %v526 = vadd.f32 %v525, -0.4999988
    %v527 = vmul.f32 %v522, %v526
    %v528 = vadd.f32 1.0, %v527
    %v529 = vmul.f32 %v520, %v520
    %v530 = vmul.f32 %v529, -0.00019511016
    %v531 = vadd.f32 %v530, 0.008332121
    %v532 = vmul.f32 %v529, %v531
    %v533 = vadd.f32 %v532, -0.16666654
    %v534 = vmul.f32 %v529, %v533
    %v535 = vadd.f32 %v534, 1.0
    %v536 = vmul.f32 %v535, %v520
    %vm537 = vweird.f32 %v239
    %v538 = vand.u32 %v521, 3
    %vm539 = vcmp.lt.s32.totalorder %v538, 2
    %vm540 = vcmp.eq.s32.totalorder %v538, 0
    %v541 = vxor.u32 %v536, 2147483648
    %v542 = vsel %vm540, %v528, %v541
    %vm543 = vcmp.eq.s32.totalorder %v538, 2
    %v544 = vxor.u32 %v528, 2147483648
    %v545 = vsel %vm543, %v544, %v536
    %v546 = vsel %vm539, %v542, %v545
    %v547 = vsel %vm537, nan, %v546
    %v548 = vand.u32 2147483647, %v238
    %vm549 = vcmp.le.f32.partialorder %v548, 0.7853982
    %vm550 = vcmp.lt.s32.totalorder %v238, 0
    %v551 = vand.u32 %v238, 2139095040
    %v552 = vshrl.u32 %v551, 23
    %v553 = vsub.s32 %v552, 127
    %v554 = vand.u32 2147483647, %v238
    %v555 = vand.u32 %v554, 8388607
    %v556 = vor.u32 %v555, 8388608
    %v557 = vsub.s32 0, %v556
    %v558 = vadd.s32 %v553, 1
    %vm559 = vcmp.gt.s32.totalorder %v558, 0
    %v560 = vsel %vm559, %v558, 0
    %v561 = vshrl.u32 %v560, 5
    %v562 = vand.u32 %v560, 31
    %v563 = vsub.s32 32, %v562
    %v564 = vshrl.u32 683565275, %v563
    %v565 = vshll.u32 683565275, %v562
    %v566 = vshrl.u32 2475754826, %v563
    %v567 = vor.u32 %v565, %v566
    %v568 = vshll.u32 2475754826, %v562
    %v569 = vshrl.u32 2131351028, %v563
    %v570 = vor.u32 %v568, %v569
    %v571 = vshll.u32 2131351028, %v562
    %v572 = vshrl.u32 2102212464, %v563
    %v573 = vor.u32 %v571, %v572
    %v574 = vshll.u32 2102212464, %v562
    %v575 = vshrl.u32 920167782, %v563
    %v576 = vor.u32 %v574, %v575
    %v577 = vshll.u32 920167782, %v562
    %v578 = vshrl.u32 1326507024, %v563
    %v579 = vor.u32 %v577, %v578
    %vm580 = vcmp.lt.s32.totalorder %v561, 1
    %vm581 = vcmp.lt.s32.totalorder %v561, 2
    %vm582 = vcmp.lt.s32.totalorder %v561, 3
    %vm583 = vcmp.lt.s32.totalorder %v561, 4
    %v584 = vsel %vm580, %v564, %v567
    %v585 = vsel %vm583, %v573, 2102212464
    %v586 = vsel %vm582, %v570, %v585
    %v587 = vsel %vm581, %v584, %v586
    %v588 = vsel %vm580, %v567, %v570
    %v589 = vsel %vm583, %v576, 920167782
    %v590 = vsel %vm582, %v573, %v589
    %v591 = vsel %vm581, %v588, %v590
    %v592 = vsel %vm580, %v570, %v573
    %v593 = vsel %vm583, %v579, 1326507024
    %v594 = vsel %vm582, %v576, %v593
    %v595 = vsel %vm581, %v592, %v594
    %v596 = vshll.u32 %v556, 8
    %v597 = vand.u32 %v596, 65535
    %v598 = vshrl.u32 %v596, 16
    %v599 = vand.u32 %v595, 65535
    %v600 = vshrl.u32 %v595, 16
    %v601 = vmul.u32 %v597, %v599
    %v602 = vmul.u32 %v597, %v600
    %v603 = vmul.u32 %v598, %v599
    %v604 = vmul.u32 %v598, %v600
    %v605 = vshll.u32 %v602, 16
    %v606 = vshrl.u32 %v602, 16
    %v607 = vshll.u32 %v603, 16
    %v608 = vshrl.u32 %v603, 16
    %vm609 = vc.u32 %v601, %v605
    %v610 = vsel %vm609, 1, 0
    %v611 = vadd.s32 %v601, %v605
    %v612 = vadd.s32 %v604, %v610
    %vm613 = vc.u32 %v611, %v607
    %v614 = vsel %vm613, 1, 0
    %v615 = vadd.s32 %v611, %v607
    %v616 = vadd.s32 %v612, %v614
    %v617 = vadd.s32 %v616, %v606
    %v618 = vadd.s32 %v617, %v608
    %v619 = vand.u32 %v596, 65535
    %v620 = vshrl.u32 %v596, 16
    %v621 = vand.u32 %v591, 65535
    %v622 = vshrl.u32 %v591, 16
    %v623 = vmul.u32 %v619, %v621
    %v624 = vmul.u32 %v619, %v622
    %v625 = vmul.u32 %v620, %v621
    %v626 = vmul.u32 %v620, %v622
    %v627 = vshll.u32 %v624, 16
    %v628 = vshrl.u32 %v624, 16
    %v629 = vshll.u32 %v625, 16
    %v630 = vshrl.u32 %v625, 16
    %vm631 = vc.u32 %v623, %v627
    %v632 = vsel %vm631, 1, 0
    %v633 = vadd.s32 %v623, %v627
    %v634 = vadd.s32 %v626, %v632
    %vm635 = vc.u32 %v633, %v629
    %v636 = vsel %vm635, 1, 0
    %v637 = vadd.s32 %v633, %v629
    %v638 = vadd.s32 %v634, %v636
    %v639 = vadd.s32 %v638, %v628
    %v640 = vadd.s32 %v639, %v630
    %v641 = vmul.u32 %v596, %v587
    %v642 = vadd.s32 %v618, %v637
    %vm643 = vc.u32 %v618, %v637
    %v644 = vadd.s32 %v640, 1
    %v645 = vsel %vm643, %v644, %v640
    %v646 = vadd.s32 %v641, %v645
    %v647 = vadd.s32 %v646, 536870912
    %v648 = vshrl.u32 %v647, 30
    %v649 = vshll.u32 %v648, 30
    %v650 = vsub.s32 %v646, %v649
    %vm651 = vcmp.lt.s32.totalorder %v650, 0
    %v652 = vsub.s32 0, %v650
    %v653 = vsel %vm651, %v652, %v650
    %v654 = vclz %v653
    %v655 = vsub.s32 %v654, 2
    %vm656 = vcmp.gt.s32.totalorder 0, %v655
    %v657 = vsel %vm656, 0, %v655
    %v658 = vsub.s32 32, %v657
    %v659 = vshll.u32 %v650, %v657
    %v660 = vshrl.u32 %v642, %v658
    %v661 = vor.u32 %v659, %v660
    %v662 = vsub.s32 4294967266, %v657
    %v663 = vadd.s32 %v662, 127
    %v664 = vshll.u32 %v663, 23
    %v665 = vor.u32 4788187, %v664
    %v666 = vand.u32 2147483647, %v665
    %v668 = vcvt.s32.f32 %v661
    %v669 = vmul.f32 %v668, %v666
    %v670 = vxor.u32 %v669, 2147483648
    %v671 = vsel %vm550, %v670, %v669
    %v672 = vsub.s32 4, %v648
    %v673 = vsel %vm550, %v672, %v648
    %v674 = vsel %vm549, %v238, %v671
    %v675 = vsel %vm549, 0, %v673
    %v676 = vmul.f32 %v674, %v674
    %v677 = vmul.f32 %v676, -0.001358992
    %v678 = vadd.f32 %v677, 0.041655596
    %v679 = vmul.f32 %v676, %v678
    %v680 = vadd.f32 %v679, -0.4999988
    %v681 = vmul.f32 %v676, %v680
    %v682 = vadd.f32 1.0, %v681
    %v683 = vmul.f32 %v674, %v674
    %v684 = vmul.f32 %v683, -0.00019511016
    %v685 = vadd.f32 %v684, 0.008332121
    %v686 = vmul.f32 %v683, %v685
    %v687 = vadd.f32 %v686, -0.16666654
    %v688 = vmul.f32 %v683, %v687
    %v689 = vadd.f32 %v688, 1.0
    %v690 = vmul.f32 %v689, %v674
    %vm691 = vweird.f32 %v238
    %v692 = vadd.s32 %v675, 3
    %v693 = vand.u32 %v692, 3
    %vm694 = vcmp.lt.s32.totalorder %v693, 2
    %vm695 = vcmp.eq.s32.totalorder %v693, 0
    %v696 = vxor.u32 %v690, 2147483648
    %v697 = vsel %vm695, %v682, %v696
    %vm698 = vcmp.eq.s32.totalorder %v693, 2
    %v699 = vxor.u32 %v682, 2147483648
    %v700 = vsel %vm698, %v699, %v690
    %v701 = vsel %vm694, %v697, %v700
    %v702 = vsel %vm691, nan, %v701
    %v703 = vand.u32 2147483647, %v239
    %vm704 = vcmp.le.f32.partialorder %v703, 0.7853982
    %vm705 = vcmp.lt.s32.totalorder %v239, 0
    %v706 = vand.u32 %v239, 2139095040
    %v707 = vshrl.u32 %v706, 23
    %v708 = vsub.s32 %v707, 127
    %v709 = vand.u32 2147483647, %v239
    %v710 = vand.u32 %v709, 8388607
    %v711 = vor.u32 %v710, 8388608
    %v712 = vsub.s32 0, %v711
    %v713 = vadd.s32 %v708, 1
    %vm714 = vcmp.gt.s32.totalorder %v713, 0
    %v715 = vsel %vm714, %v713, 0
    %v716 = vshrl.u32 %v715, 5
    %v717 = vand.u32 %v715, 31
    %v718 = vsub.s32 32, %v717
    %v719 = vshrl.u32 683565275, %v718
    %v720 = vshll.u32 683565275, %v717
    %v721 = vshrl.u32 2475754826, %v718
    %v722 = vor.u32 %v720, %v721
    %v723 = vshll.u32 2475754826, %v717
    %v724 = vshrl.u32 2131351028, %v718
    %v725 = vor.u32 %v723, %v724
    %v726 = vshll.u32 2131351028, %v717
    %v727 = vshrl.u32 2102212464, %v718
    %v728 = vor.u32 %v726, %v727
    %v729 = vshll.u32 2102212464, %v717
    %v730 = vshrl.u32 920167782, %v718
    %v731 = vor.u32 %v729, %v730
    %v732 = vshll.u32 920167782, %v717
    %v733 = vshrl.u32 1326507024, %v718
    %v734 = vor.u32 %v732, %v733
    %vm735 = vcmp.lt.s32.totalorder %v716, 1
    %vm736 = vcmp.lt.s32.totalorder %v716, 2
    %vm737 = vcmp.lt.s32.totalorder %v716, 3
    %vm738 = vcmp.lt.s32.totalorder %v716, 4
    %v739 = vsel %vm735, %v719, %v722
    %v740 = vsel %vm738, %v728, 2102212464
    %v741 = vsel %vm737, %v725, %v740
    %v742 = vsel %vm736, %v739, %v741
    %v743 = vsel %vm735, %v722, %v725
    %v744 = vsel %vm738, %v731, 920167782
    %v745 = vsel %vm737, %v728, %v744
    %v746 = vsel %vm736, %v743, %v745
    %v747 = vsel %vm735, %v725, %v728
    %v748 = vsel %vm738, %v734, 1326507024
    %v749 = vsel %vm737, %v731, %v748
    %v750 = vsel %vm736, %v747, %v749
    %v751 = vshll.u32 %v711, 8
    %v752 = vand.u32 %v751, 65535
    %v753 = vshrl.u32 %v751, 16
    %v754 = vand.u32 %v750, 65535
    %v755 = vshrl.u32 %v750, 16
    %v756 = vmul.u32 %v752, %v754
    %v757 = vmul.u32 %v752, %v755
    %v758 = vmul.u32 %v753, %v754
    %v759 = vmul.u32 %v753, %v755
    %v760 = vshll.u32 %v757, 16
    %v761 = vshrl.u32 %v757, 16
    %v762 = vshll.u32 %v758, 16
    %v763 = vshrl.u32 %v758, 16
    %vm764 = vc.u32 %v756, %v760
    %v765 = vsel %vm764, 1, 0
    %v766 = vadd.s32 %v756, %v760
    %v767 = vadd.s32 %v759, %v765
    %vm768 = vc.u32 %v766, %v762
    %v769 = vsel %vm768, 1, 0
    %v770 = vadd.s32 %v766, %v762
    %v771 = vadd.s32 %v767, %v769
    %v772 = vadd.s32 %v771, %v761
    %v773 = vadd.s32 %v772, %v763
    %v774 = vand.u32 %v751, 65535
    %v775 = vshrl.u32 %v751, 16
    %v776 = vand.u32 %v746, 65535
    %v777 = vshrl.u32 %v746, 16
    %v778 = vmul.u32 %v774, %v776
    %v779 = vmul.u32 %v774, %v777
    %v780 = vmul.u32 %v775, %v776
    %v781 = vmul.u32 %v775, %v777
    %v782 = vshll.u32 %v779, 16
    %v783 = vshrl.u32 %v779, 16
    %v784 = vshll.u32 %v780, 16
    %v785 = vshrl.u32 %v780, 16
    %vm786 = vc.u32 %v778, %v782
    %v787 = vsel %vm786, 1, 0
    %v788 = vadd.s32 %v778, %v782
    %v789 = vadd.s32 %v781, %v787
    %vm790 = vc.u32 %v788, %v784
    %v791 = vsel %vm790, 1, 0
    %v792 = vadd.s32 %v788, %v784
    %v793 = vadd.s32 %v789, %v791
    %v794 = vadd.s32 %v793, %v783
    %v795 = vadd.s32 %v794, %v785
    %v796 = vmul.u32 %v751, %v742
    %v797 = vadd.s32 %v773, %v792
    %vm798 = vc.u32 %v773, %v792
    %v799 = vadd.s32 %v795, 1
    %v800 = vsel %vm798, %v799, %v795
    %v801 = vadd.s32 %v796, %v800
    %v802 = vadd.s32 %v801, 536870912
    %v803 = vshrl.u32 %v802, 30
    %v804 = vshll.u32 %v803, 30
    %v805 = vsub.s32 %v801, %v804
    %vm806 = vcmp.lt.s32.totalorder %v805, 0
    %v807 = vsub.s32 0, %v805
    %v808 = vsel %vm806, %v807, %v805
    %v809 = vclz %v808
    %v810 = vsub.s32 %v809, 2
    %vm811 = vcmp.gt.s32.totalorder 0, %v810
    %v812 = vsel %vm811, 0, %v810
    %v813 = vsub.s32 32, %v812
    %v814 = vshll.u32 %v805, %v812
    %v815 = vshrl.u32 %v797, %v813
    %v816 = vor.u32 %v814, %v815
    %v817 = vsub.s32 4294967266, %v812
    %v818 = vadd.s32 %v817, 127
    %v819 = vshll.u32 %v818, 23
    %v820 = vor.u32 4788187, %v819
    %v821 = vand.u32 2147483647, %v820
    %v823 = vcvt.s32.f32 %v816
    %v824 = vmul.f32 %v823, %v821
    %v825 = vxor.u32 %v824, 2147483648
    %v826 = vsel %vm705, %v825, %v824
    %v827 = vsub.s32 4, %v803
    %v828 = vsel %vm705, %v827, %v803
    %v829 = vsel %vm704, %v239, %v826
    %v830 = vsel %vm704, 0, %v828
    %v831 = vmul.f32 %v829, %v829
    %v832 = vmul.f32 %v831, -0.001358992
    %v833 = vadd.f32 %v832, 0.041655596
    %v834 = vmul.f32 %v831, %v833
    %v835 = vadd.f32 %v834, -0.4999988
    %v836 = vmul.f32 %v831, %v835
    %v837 = vadd.f32 1.0, %v836
    %v838 = vmul.f32 %v829, %v829
    %v839 = vmul.f32 %v838, -0.00019511016
    %v840 = vadd.f32 %v839, 0.008332121
    %v841 = vmul.f32 %v838, %v840
    %v842 = vadd.f32 %v841, -0.16666654
    %v843 = vmul.f32 %v838, %v842
    %v844 = vadd.f32 %v843, 1.0
    %v845 = vmul.f32 %v844, %v829
    %vm846 = vweird.f32 %v239
    %v847 = vadd.s32 %v830, 3
    %v848 = vand.u32 %v847, 3
    %vm849 = vcmp.lt.s32.totalorder %v848, 2
    %vm850 = vcmp.eq.s32.totalorder %v848, 0
    %v851 = vxor.u32 %v845, 2147483648
    %v852 = vsel %vm850, %v837, %v851
    %vm853 = vcmp.eq.s32.totalorder %v848, 2
    %v854 = vxor.u32 %v837, 2147483648
    %v855 = vsel %vm853, %v854, %v845
    %v856 = vsel %vm849, %v852, %v855
    %v857 = vsel %vm846, nan, %v856
    %v858 = vld [vmem:[#allocation5] sm:$0xff]
    %v859 = vperm.slane %v858, 0
    %v860 = vmul.f32 %v859, %v393
    %v861 = vmul.f32 %v859, %v547
    %v862 = vperm.slane %v858, 1
    %v863 = vmul.f32 %v862, %v702
    %v864 = vmul.f32 %v862, %v857
    %v865 = vsub.f32 %v860, %v863
    %v866 = vsub.f32 %v861, %v864
    %v867 = vperm.slane %v858, 2
    %v868 = vmul.f32 %v867, %v393
    %v869 = vmul.f32 %v867, %v547
    %v870 = vperm.slane %v858, 3
    %v871 = vmul.f32 %v870, %v702
    %v872 = vmul.f32 %v870, %v857
    %v873 = vsub.f32 %v868, %v871
    %v874 = vsub.f32 %v869, %v872
    %v875 = vperm.slane %v858, 4
    %v876 = vmul.f32 %v875, %v393
    %v877 = vmul.f32 %v875, %v547
    %v878 = vperm.slane %v858, 5
    %v879 = vmul.f32 %v878, %v702
    %v880 = vmul.f32 %v878, %v857
    %v881 = vsub.f32 %v876, %v879
    %v882 = vsub.f32 %v877, %v880
    %v883 = vld [vmem:[#allocation5 + $0x8] sm:$0xff]
    %v884 = vld [vmem:[#allocation5 + $0x10] sm:$0xff]
    %v885 = vld [vmem:[#allocation5 + $0x18] sm:$0xff]
    %v886 = vld [vmem:[#allocation5 + $0x20] sm:$0xff]
    %v888 = vsel %vm188, %v873, 0
    %v891 = vsel %vm188, %v874, 0
    %893 = vmatpush.msra.mxu0 0.0
    %894 = vmatpush.msra.mxu0 0.0
    %895 = vmatpush.msra.mxu0 0.0
    %896 = vmatpush.msra.mxu0 0.0
    %897 = vmatpush.msra.mxu0 0.0
    %898 = vmatpush.msra.mxu0 0.0
    %899 = vmatpush.msra.mxu0 0.0
    %900 = vmatpush.msra.mxu0 0.0
    %901 = vmatpush.msra.mxu0 0.0
    %902 = vmatpush.msra.mxu0 0.0
    %903 = vmatpush.msra.mxu0 0.0
    %904 = vmatpush.msra.mxu0 0.0
    %905 = vmatpush.msra.mxu0 %v886
    %906 = vmatpush.msra.mxu0 %v885
    %907 = vmatpush.msra.mxu0 %v884
    %908 = vmatpush.msra.mxu0 %v883
    %909 = vmatmul.f32.gmra.mxu0 %v888
    %v910 = vpop.f32.mrf.mxu0
    %v911 = vadd.f32 0.0, %v910
    %912 = vmatmul.f32.gmra.mxu0 %v891
    %v913 = vpop.f32.mrf.mxu0
    %v914 = vadd.f32 0.0, %v913
    %915 = vdwg.mxu0
    %920 = vrot.lane.b32.xlu0 %v883, 124
    %v921 = vpop.permute.xlu0 %920
    %922 = vrot.lane.b32.xlu0 %v884, 124
    %v923 = vpop.permute.xlu0 %922
    %924 = vrot.lane.b32.xlu0 %v885, 124
    %v925 = vpop.permute.xlu0 %924
    %926 = vrot.lane.b32.xlu0 %v886, 124
    %v927 = vpop.permute.xlu0 %926
    %v933 = vsel %vm188, %v881, 0
    %v936 = vsel %vm188, %v882, 0
    %938 = vmatpush.msra.mxu0 0.0
    %939 = vmatpush.msra.mxu0 0.0
    %940 = vmatpush.msra.mxu0 0.0
    %941 = vmatpush.msra.mxu0 0.0
    %942 = vmatpush.msra.mxu0 0.0
    %943 = vmatpush.msra.mxu0 0.0
    %944 = vmatpush.msra.mxu0 0.0
    %945 = vmatpush.msra.mxu0 0.0
    %946 = vmatpush.msra.mxu0 0.0
    %947 = vmatpush.msra.mxu0 0.0
    %948 = vmatpush.msra.mxu0 0.0
    %949 = vmatpush.msra.mxu0 0.0
    %950 = vmatpush.msra.mxu0 %v927
    %951 = vmatpush.msra.mxu0 %v925
    %952 = vmatpush.msra.mxu0 %v923
    %953 = vmatpush.msra.mxu0 %v921
    %954 = vmatmul.f32.gmra.mxu0 %v933
    %v955 = vpop.f32.mrf.mxu0
    %v956 = vadd.f32 0.0, %v955
    %957 = vmatmul.f32.gmra.mxu0 %v936
    %v958 = vpop.f32.mrf.mxu0
    %v959 = vadd.f32 0.0, %v958
    %960 = vdwg.mxu0
    %v961 = vld [vmem:[#allocation5 + $0x28] sm:$0xf]
    %v962 = vld [vmem:[#allocation5 + $0x30] sm:$0xff]
    %v963 = vld [vmem:[#allocation5 + $0x38] sm:$0xff]
    %v964 = vld [vmem:[#allocation5 + $0x40] sm:$0xff]
    %v965 = vld [vmem:[#allocation5 + $0x48] sm:$0xff]
    %v966 = vld [vmem:[#allocation5 + $0x50] sm:$0xff]
    %v967 = vld [vmem:[#allocation5 + $0x58] sm:$0xff]
    %v968 = vld [vmem:[#allocation5 + $0x60] sm:$0xff]
    %v969 = vld [vmem:[#allocation5 + $0x68] sm:$0xff]
    %v970 = vld [vmem:[#allocation5 + $0x70] sm:$0xff]
    %v971 = vld [vmem:[#allocation5 + $0x78] sm:$0xff]
    %v972 = vld [vmem:[#allocation5 + $0x80] sm:$0xff]
    %v973 = vld [vmem:[#allocation5 + $0x88] sm:$0xff]
    %v974 = vld [vmem:[#allocation5 + $0x90] sm:$0xff]
    %v975 = vld [vmem:[#allocation5 + $0x98] sm:$0xff]
    %v976 = vld [vmem:[#allocation5 + $0xa0] sm:$0xff]
    %v977 = vld [vmem:[#allocation5 + $0xa8] sm:$0xff]
    %v978 = vld [vmem:[#allocation5 + $0xb0] sm:$0xff]
    %v979 = vld [vmem:[#allocation5 + $0xb8] sm:$0xff]
    %v980 = vld [vmem:[#allocation5 + $0xc0] sm:$0xff]
    %v981 = vld [vmem:[#allocation5 + $0xc8] sm:$0xff]
    %v982 = vld [vmem:[#allocation5 + $0xd0] sm:$0xff]
    %v983 = vld [vmem:[#allocation5 + $0xd8] sm:$0xff]
    %v984 = vld [vmem:[#allocation5 + $0xe0] sm:$0xff]
    %v985 = vld [vmem:[#allocation5 + $0xe8] sm:$0xff]
    %v986 = vld [vmem:[#allocation5 + $0xf0] sm:$0xff]
    %v987 = vld [vmem:[#allocation5 + $0xf8] sm:$0xff]
    %v988 = vld [vmem:[#allocation5 + $0x100] sm:$0xff]
    %v989 = vld [vmem:[#allocation5 + $0x108] sm:$0xff]
    %v991 = vsel %vm54, %v911, 0
    %v994 = vsel %vm54, %v914, 0
    %v997 = vsel %vm59, %v961, 0
    %999 = vmatpush.msra.mxu0 0.0
    %1000 = vmatpush.msra.mxu0 0.0
    %1001 = vmatpush.msra.mxu0 0.0
    %1002 = vmatpush.msra.mxu0 0.0
    %1003 = vmatpush.msra.mxu0 0.0
    %1004 = vmatpush.msra.mxu0 0.0
    %1005 = vmatpush.msra.mxu0 0.0
    %1006 = vmatpush.msra.mxu0 0.0
    %1007 = vmatpush.msra.mxu0 0.0
    %1008 = vmatpush.msra.mxu0 0.0
    %1009 = vmatpush.msra.mxu0 0.0
    %1010 = vmatpush.msra.mxu0 0.0
    %1011 = vmatpush.msra.mxu0 0.0
    %1012 = vmatpush.msra.mxu0 0.0
    %1013 = vmatpush.msra.mxu0 0.0
    %1014 = vmatpush.msra.mxu0 %v997
    %1015 = vmatmul.f32.gmra.mxu0 %v991
    %v1016 = vpop.f32.mrf.mxu0
    %v1017 = vadd.f32 0.0, %v1016
    %1018 = vmatmul.f32.gmra.mxu0 %v994
    %v1019 = vpop.f32.mrf.mxu0
    %v1020 = vadd.f32 0.0, %v1019
    %1021 = vdwg.mxu0
    %v1023 = vsel %vm54, %v956, 0
    %v1026 = vsel %vm54, %v959, 0
    %1028 = vmatpush.msra.mxu0 0.0
    %1029 = vmatpush.msra.mxu0 0.0
    %1030 = vmatpush.msra.mxu0 0.0
    %1031 = vmatpush.msra.mxu0 0.0
    %1032 = vmatpush.msra.mxu0 0.0
    %1033 = vmatpush.msra.mxu0 0.0
    %1034 = vmatpush.msra.mxu0 0.0
    %1035 = vmatpush.msra.mxu0 0.0
    %1036 = vmatpush.msra.mxu0 0.0
    %1037 = vmatpush.msra.mxu0 0.0
    %1038 = vmatpush.msra.mxu0 0.0
    %1039 = vmatpush.msra.mxu0 0.0
    %1040 = vmatpush.msra.mxu0 0.0
    %1041 = vmatpush.msra.mxu0 0.0
    %1042 = vmatpush.msra.mxu0 0.0
    %1043 = vmatpush.msra.mxu0 %v997
    %1044 = vmatmul.f32.gmra.mxu0 %v1023
    %v1045 = vpop.f32.mrf.mxu0
    %v1046 = vadd.f32 0.0, %v1045
    %1047 = vmatmul.f32.gmra.mxu0 %v1026
    %v1048 = vpop.f32.mrf.mxu0
    %v1049 = vadd.f32 0.0, %v1048
    %1050 = vdwg.mxu0
    %v1051 = vmul.f32 %v1046, %v962
    %v1052 = vmul.f32 %v1049, %v963
    %vm1053 = vcmask 523264
    %v1054 = vsel %vm1053, %v1051, 0.0
    %v1055 = vsel %vm1053, %v1052, 0.0
    %v1056 = vadd.f32 %v1054, %v1055
    %v1057 = vrot.slane %v1056, 4
    %v1058 = vadd.f32 %v1056, %v1057
    %v1059 = vrot.slane %v1058, 2
    %v1060 = vadd.f32 %v1058, %v1059
    %v1061 = vrot.slane %v1060, 1
    %v1062 = vadd.f32 %v1060, %v1061
    %v1063 = vsub.f32 %v1017, %v1062
    %v1064 = vsub.f32 %v1020, %v1062
    %v1065 = vmul.f32 %v1063, %v1063
    %v1066 = vmul.f32 %v1064, %v1064
    %v1067 = vsub.f32 0.0, %v1065
    %v1068 = vsub.f32 0.0, %v1066
    %v1069 = vmul.f32 %v1067, 0.35355338
    %v1070 = vmul.f32 %v1068, 0.35355338
    %v1071 = vmul.f32 %v1069, 1.442695
    %v1072 = vpow.pop %v1071
    %v1073 = vmul.f32 %v1070, 1.442695
    %v1074 = vpow.pop %v1073
    %v1075 = vmul.f32 %v1072, %v964
    %v1076 = vmul.f32 %v1074, %v965
    %v1077 = vsub.f32 1.0, %v964
    %v1078 = vsub.f32 1.0, %v965
    %v1080 = vsel %vm1053, %v1075, 0
    %v1083 = vsel %vm1053, %v1076, 0
    %1085 = vmatpush.msra.mxu0 0.0
    %1086 = vmatpush.msra.mxu0 0.0
    %1087 = vmatpush.msra.mxu0 0.0
    %1088 = vmatpush.msra.mxu0 0.0
    %1089 = vmatpush.msra.mxu0 0.0
    %1090 = vmatpush.msra.mxu0 0.0
    %1091 = vmatpush.msra.mxu0 0.0
    %1092 = vmatpush.msra.mxu0 0.0
    %1093 = vmatpush.msra.mxu0 %v973
    %1094 = vmatpush.msra.mxu0 %v972
    %1095 = vmatpush.msra.mxu0 %v971
    %1096 = vmatpush.msra.mxu0 %v970
    %1097 = vmatpush.msra.mxu0 %v969
    %1098 = vmatpush.msra.mxu0 %v968
    %1099 = vmatpush.msra.mxu0 %v967
    %1100 = vmatpush.msra.mxu0 %v966
    %1101 = vmatmul.f32.gmra.mxu0 %v1080
    %v1102 = vpop.f32.mrf.mxu0
    %v1103 = vadd.f32 %v1077, %v1102
    %1104 = vmatmul.f32.gmra.mxu0 %v1083
    %v1105 = vpop.f32.mrf.mxu0
    %v1106 = vadd.f32 %v1078, %v1105
    %1107 = vdwg.mxu0
    %v1108 = vrcp.pop %v1103
    %v1109 = vrcp.pop %v1106
    %v1110 = vmul.f32 %v1103, %v1108
    %v1111 = vmul.f32 %v1106, %v1109
    %v1112 = vsub.f32 2.0, %v1110
    %v1113 = vsub.f32 2.0, %v1111
    %v1114 = vmul.f32 %v1108, %v1112
    %v1115 = vmul.f32 %v1109, %v1113
    %v1116 = vmul.f32 %v1103, %v1114
    %v1117 = vmul.f32 %v1106, %v1115
    %v1118 = vsub.f32 2.0, %v1116
    %v1119 = vsub.f32 2.0, %v1117
    %v1120 = vmul.f32 %v1114, %v1118
    %v1121 = vmul.f32 %v1115, %v1119
    %v1122 = vmul.f32 %v1075, %v1120
    %v1123 = vmul.f32 %v1076, %v1121
    %vm1124 = vcmask 130048
    %v1126 = vsel %vm1124, %v974, 0
    %v1129 = vsel %vm1124, %v975, 0
    %v1132 = vsel %vm1124, %v976, 0
    %v1135 = vsel %vm1124, %v977, 0
    %v1138 = vsel %vm1124, %v978, 0
    %v1141 = vsel %vm1124, %v979, 0
    %v1144 = vsel %vm1124, %v980, 0
    %v1147 = vsel %vm1124, %v981, 0
    %1149 = vmatpush.msra.mxu0 0.0
    %1150 = vmatpush.msra.mxu0 0.0
    %1151 = vmatpush.msra.mxu0 0.0
    %1152 = vmatpush.msra.mxu0 0.0
    %1153 = vmatpush.msra.mxu0 0.0
    %1154 = vmatpush.msra.mxu0 0.0
    %1155 = vmatpush.msra.mxu0 0.0
    %1156 = vmatpush.msra.mxu0 0.0
    %1157 = vmatpush.msra.mxu0 0.0
    %1158 = vmatpush.msra.mxu0 0.0
    %1159 = vmatpush.msra.mxu0 0.0
    %1160 = vmatpush.msra.mxu0 0.0
    %1161 = vmatpush.msra.mxu0 0.0
    %1162 = vmatpush.msra.mxu0 0.0
    %1163 = vmatpush.msra.mxu0 %v866
    %1164 = vmatpush.msra.mxu0 %v865
    %1165 = vmatmul.f32.gmra.mxu0 %v1126
    %v1166 = vpop.f32.mrf.mxu0
    %v1167 = vadd.f32 0.0, %v1166
    %1168 = vmatmul.f32.gmra.mxu0 %v1129
    %v1169 = vpop.f32.mrf.mxu0
    %v1170 = vadd.f32 0.0, %v1169
    %1171 = vmatmul.f32.gmra.mxu0 %v1132
    %v1172 = vpop.f32.mrf.mxu0
    %v1173 = vadd.f32 0.0, %v1172
    %1174 = vmatmul.f32.gmra.mxu0 %v1135
    %v1175 = vpop.f32.mrf.mxu0
    %v1176 = vadd.f32 0.0, %v1175
    %1177 = vmatmul.f32.gmra.mxu0 %v1138
    %v1178 = vpop.f32.mrf.mxu0
    %v1179 = vadd.f32 0.0, %v1178
    %1180 = vmatmul.f32.gmra.mxu0 %v1141
    %v1181 = vpop.f32.mrf.mxu0
    %v1182 = vadd.f32 0.0, %v1181
    %1183 = vmatmul.f32.gmra.mxu0 %v1144
    %v1184 = vpop.f32.mrf.mxu0
    %v1185 = vadd.f32 0.0, %v1184
    %1186 = vmatmul.f32.gmra.mxu0 %v1147
    %v1187 = vpop.f32.mrf.mxu0
    %v1188 = vadd.f32 0.0, %v1187
    %1189 = vdwg.mxu0
    %v1190 = vmul.f32 %v1167, %v982
    %v1191 = vmul.f32 %v1170, %v983
    %v1192 = vmul.f32 %v1173, %v984
    %v1193 = vmul.f32 %v1176, %v985
    %v1194 = vmul.f32 %v1179, %v986
    %v1195 = vmul.f32 %v1182, %v987
    %v1196 = vmul.f32 %v1185, %v988
    %v1197 = vmul.f32 %v1188, %v989
    %v1199 = vsel %vm1053, %v1122, 0
    %v1202 = vsel %vm1053, %v1123, 0
    %1204 = vmatpush.msra.mxu0 0.0
    %1205 = vmatpush.msra.mxu0 0.0
    %1206 = vmatpush.msra.mxu0 0.0
    %1207 = vmatpush.msra.mxu0 0.0
    %1208 = vmatpush.msra.mxu0 0.0
    %1209 = vmatpush.msra.mxu0 0.0
    %1210 = vmatpush.msra.mxu0 0.0
    %1211 = vmatpush.msra.mxu0 0.0
    %1212 = vmatpush.msra.mxu0 %v1197
    %1213 = vmatpush.msra.mxu0 %v1196
    %1214 = vmatpush.msra.mxu0 %v1195
    %1215 = vmatpush.msra.mxu0 %v1194
    %1216 = vmatpush.msra.mxu0 %v1193
    %1217 = vmatpush.msra.mxu0 %v1192
    %1218 = vmatpush.msra.mxu0 %v1191
    %1219 = vmatpush.msra.mxu0 %v1190
    %1220 = vmatmul.f32.gmra.mxu0 %v1199
    %v1221 = vpop.f32.mrf.mxu0
    %v1222 = vadd.f32 0.0, %v1221
    %1223 = vmatmul.f32.gmra.mxu0 %v1202
    %v1224 = vpop.f32.mrf.mxu0
    %v1225 = vadd.f32 0.0, %v1224
    %1226 = vdwg.mxu0
    %v1227 = vand.u32 2147483647, %v1222
    %vm1228 = vcmp.le.f32.partialorder %v1227, 0.7853982
    %vm1229 = vcmp.lt.s32.totalorder %v1222, 0
    %v1230 = vand.u32 %v1222, 2139095040
    %v1231 = vshrl.u32 %v1230, 23
    %v1232 = vsub.s32 %v1231, 127
    %v1233 = vand.u32 2147483647, %v1222
    %v1234 = vand.u32 %v1233, 8388607
    %v1235 = vor.u32 %v1234, 8388608
    %v1236 = vsub.s32 0, %v1235
    %v1237 = vadd.s32 %v1232, 1
    %vm1238 = vcmp.gt.s32.totalorder %v1237, 0
    %v1239 = vsel %vm1238, %v1237, 0
    %v1240 = vshrl.u32 %v1239, 5
    %v1241 = vand.u32 %v1239, 31
    %v1242 = vsub.s32 32, %v1241
    %v1243 = vshrl.u32 683565275, %v1242
    %v1244 = vshll.u32 683565275, %v1241
    %v1245 = vshrl.u32 2475754826, %v1242
    %v1246 = vor.u32 %v1244, %v1245
    %v1247 = vshll.u32 2475754826, %v1241
    %v1248 = vshrl.u32 2131351028, %v1242
    %v1249 = vor.u32 %v1247, %v1248
    %v1250 = vshll.u32 2131351028, %v1241
    %v1251 = vshrl.u32 2102212464, %v1242
    %v1252 = vor.u32 %v1250, %v1251
    %v1253 = vshll.u32 2102212464, %v1241
    %v1254 = vshrl.u32 920167782, %v1242
    %v1255 = vor.u32 %v1253, %v1254
    %v1256 = vshll.u32 920167782, %v1241
    %v1257 = vshrl.u32 1326507024, %v1242
    %v1258 = vor.u32 %v1256, %v1257
    %vm1259 = vcmp.lt.s32.totalorder %v1240, 1
    %vm1260 = vcmp.lt.s32.totalorder %v1240, 2
    %vm1261 = vcmp.lt.s32.totalorder %v1240, 3
    %vm1262 = vcmp.lt.s32.totalorder %v1240, 4
    %v1263 = vsel %vm1259, %v1243, %v1246
    %v1264 = vsel %vm1262, %v1252, 2102212464
    %v1265 = vsel %vm1261, %v1249, %v1264
    %v1266 = vsel %vm1260, %v1263, %v1265
    %v1267 = vsel %vm1259, %v1246, %v1249
    %v1268 = vsel %vm1262, %v1255, 920167782
    %v1269 = vsel %vm1261, %v1252, %v1268
    %v1270 = vsel %vm1260, %v1267, %v1269
    %v1271 = vsel %vm1259, %v1249, %v1252
    %v1272 = vsel %vm1262, %v1258, 1326507024
    %v1273 = vsel %vm1261, %v1255, %v1272
    %v1274 = vsel %vm1260, %v1271, %v1273
    %v1275 = vshll.u32 %v1235, 8
    %v1276 = vand.u32 %v1275, 65535
    %v1277 = vshrl.u32 %v1275, 16
    %v1278 = vand.u32 %v1274, 65535
    %v1279 = vshrl.u32 %v1274, 16
    %v1280 = vmul.u32 %v1276, %v1278
    %v1281 = vmul.u32 %v1276, %v1279
    %v1282 = vmul.u32 %v1277, %v1278
    %v1283 = vmul.u32 %v1277, %v1279
    %v1284 = vshll.u32 %v1281, 16
    %v1285 = vshrl.u32 %v1281, 16
    %v1286 = vshll.u32 %v1282, 16
    %v1287 = vshrl.u32 %v1282, 16
    %vm1288 = vc.u32 %v1280, %v1284
    %v1289 = vsel %vm1288, 1, 0
    %v1290 = vadd.s32 %v1280, %v1284
    %v1291 = vadd.s32 %v1283, %v1289
    %vm1292 = vc.u32 %v1290, %v1286
    %v1293 = vsel %vm1292, 1, 0
    %v1294 = vadd.s32 %v1290, %v1286
    %v1295 = vadd.s32 %v1291, %v1293
    %v1296 = vadd.s32 %v1295, %v1285
    %v1297 = vadd.s32 %v1296, %v1287
    %v1298 = vand.u32 %v1275, 65535
    %v1299 = vshrl.u32 %v1275, 16
    %v1300 = vand.u32 %v1270, 65535
    %v1301 = vshrl.u32 %v1270, 16
    %v1302 = vmul.u32 %v1298, %v1300
    %v1303 = vmul.u32 %v1298, %v1301
    %v1304 = vmul.u32 %v1299, %v1300
    %v1305 = vmul.u32 %v1299, %v1301
    %v1306 = vshll.u32 %v1303, 16
    %v1307 = vshrl.u32 %v1303, 16
    %v1308 = vshll.u32 %v1304, 16
    %v1309 = vshrl.u32 %v1304, 16
    %vm1310 = vc.u32 %v1302, %v1306
    %v1311 = vsel %vm1310, 1, 0
    %v1312 = vadd.s32 %v1302, %v1306
    %v1313 = vadd.s32 %v1305, %v1311
    %vm1314 = vc.u32 %v1312, %v1308
    %v1315 = vsel %vm1314, 1, 0
    %v1316 = vadd.s32 %v1312, %v1308
    %v1317 = vadd.s32 %v1313, %v1315
    %v1318 = vadd.s32 %v1317, %v1307
    %v1319 = vadd.s32 %v1318, %v1309
    %v1320 = vmul.u32 %v1275, %v1266
    %v1321 = vadd.s32 %v1297, %v1316
    %vm1322 = vc.u32 %v1297, %v1316
    %v1323 = vadd.s32 %v1319, 1
    %v1324 = vsel %vm1322, %v1323, %v1319
    %v1325 = vadd.s32 %v1320, %v1324
    %v1326 = vadd.s32 %v1325, 536870912
    %v1327 = vshrl.u32 %v1326, 30
    %v1328 = vshll.u32 %v1327, 30
    %v1329 = vsub.s32 %v1325, %v1328
    %vm1330 = vcmp.lt.s32.totalorder %v1329, 0
    %v1331 = vsub.s32 0, %v1329
    %v1332 = vsel %vm1330, %v1331, %v1329
    %v1333 = vclz %v1332
    %v1334 = vsub.s32 %v1333, 2
    %vm1335 = vcmp.gt.s32.totalorder 0, %v1334
    %v1336 = vsel %vm1335, 0, %v1334
    %v1337 = vsub.s32 32, %v1336
    %v1338 = vshll.u32 %v1329, %v1336
    %v1339 = vshrl.u32 %v1321, %v1337
    %v1340 = vor.u32 %v1338, %v1339
    %v1341 = vsub.s32 4294967266, %v1336
    %v1342 = vadd.s32 %v1341, 127
    %v1343 = vshll.u32 %v1342, 23
    %v1344 = vor.u32 4788187, %v1343
    %v1345 = vand.u32 2147483647, %v1344
    %v1347 = vcvt.s32.f32 %v1340
    %v1348 = vmul.f32 %v1347, %v1345
    %v1349 = vxor.u32 %v1348, 2147483648
    %v1350 = vsel %vm1229, %v1349, %v1348
    %v1351 = vsub.s32 4, %v1327
    %v1352 = vsel %vm1229, %v1351, %v1327
    %v1353 = vsel %vm1228, %v1222, %v1350
    %v1354 = vsel %vm1228, 0, %v1352
    %v1355 = vmul.f32 %v1353, %v1353
    %v1356 = vmul.f32 %v1355, -0.001358992
    %v1357 = vadd.f32 %v1356, 0.041655596
    %v1358 = vmul.f32 %v1355, %v1357
    %v1359 = vadd.f32 %v1358, -0.4999988
    %v1360 = vmul.f32 %v1355, %v1359
    %v1361 = vadd.f32 1.0, %v1360
    %v1362 = vmul.f32 %v1353, %v1353
    %v1363 = vmul.f32 %v1362, -0.00019511016
    %v1364 = vadd.f32 %v1363, 0.008332121
    %v1365 = vmul.f32 %v1362, %v1364
    %v1366 = vadd.f32 %v1365, -0.16666654
    %v1367 = vmul.f32 %v1362, %v1366
    %v1368 = vadd.f32 %v1367, 1.0
    %v1369 = vmul.f32 %v1368, %v1353
    %vm1370 = vweird.f32 %v1222
    %v1371 = vand.u32 %v1354, 3
    %vm1372 = vcmp.lt.s32.totalorder %v1371, 2
    %vm1373 = vcmp.eq.s32.totalorder %v1371, 0
    %v1374 = vxor.u32 %v1369, 2147483648
    %v1375 = vsel %vm1373, %v1361, %v1374
    %vm1376 = vcmp.eq.s32.totalorder %v1371, 2
    %v1377 = vxor.u32 %v1361, 2147483648
    %v1378 = vsel %vm1376, %v1377, %v1369
    %v1379 = vsel %vm1372, %v1375, %v1378
    %v1380 = vsel %vm1370, nan, %v1379
    %v1381 = vand.u32 2147483647, %v1225
    %vm1382 = vcmp.le.f32.partialorder %v1381, 0.7853982
    %vm1383 = vcmp.lt.s32.totalorder %v1225, 0
    %v1384 = vand.u32 %v1225, 2139095040
    %v1385 = vshrl.u32 %v1384, 23
    %v1386 = vsub.s32 %v1385, 127
    %v1387 = vand.u32 2147483647, %v1225
    %v1388 = vand.u32 %v1387, 8388607
    %v1389 = vor.u32 %v1388, 8388608
    %v1390 = vsub.s32 0, %v1389
    %v1391 = vadd.s32 %v1386, 1
    %vm1392 = vcmp.gt.s32.totalorder %v1391, 0
    %v1393 = vsel %vm1392, %v1391, 0
    %v1394 = vshrl.u32 %v1393, 5
    %v1395 = vand.u32 %v1393, 31
    %v1396 = vsub.s32 32, %v1395
    %v1397 = vshrl.u32 683565275, %v1396
    %v1398 = vshll.u32 683565275, %v1395
    %v1399 = vshrl.u32 2475754826, %v1396
    %v1400 = vor.u32 %v1398, %v1399
    %v1401 = vshll.u32 2475754826, %v1395
    %v1402 = vshrl.u32 2131351028, %v1396
    %v1403 = vor.u32 %v1401, %v1402
    %v1404 = vshll.u32 2131351028, %v1395
    %v1405 = vshrl.u32 2102212464, %v1396
    %v1406 = vor.u32 %v1404, %v1405
    %v1407 = vshll.u32 2102212464, %v1395
    %v1408 = vshrl.u32 920167782, %v1396
    %v1409 = vor.u32 %v1407, %v1408
    %v1410 = vshll.u32 920167782, %v1395
    %v1411 = vshrl.u32 1326507024, %v1396
    %v1412 = vor.u32 %v1410, %v1411
    %vm1413 = vcmp.lt.s32.totalorder %v1394, 1
    %vm1414 = vcmp.lt.s32.totalorder %v1394, 2
    %vm1415 = vcmp.lt.s32.totalorder %v1394, 3
    %vm1416 = vcmp.lt.s32.totalorder %v1394, 4
    %v1417 = vsel %vm1413, %v1397, %v1400
    %v1418 = vsel %vm1416, %v1406, 2102212464
    %v1419 = vsel %vm1415, %v1403, %v1418
    %v1420 = vsel %vm1414, %v1417, %v1419
    %v1421 = vsel %vm1413, %v1400, %v1403
    %v1422 = vsel %vm1416, %v1409, 920167782
    %v1423 = vsel %vm1415, %v1406, %v1422
    %v1424 = vsel %vm1414, %v1421, %v1423
    %v1425 = vsel %vm1413, %v1403, %v1406
    %v1426 = vsel %vm1416, %v1412, 1326507024
    %v1427 = vsel %vm1415, %v1409, %v1426
    %v1428 = vsel %vm1414, %v1425, %v1427
    %v1429 = vshll.u32 %v1389, 8
    %v1430 = vand.u32 %v1429, 65535
    %v1431 = vshrl.u32 %v1429, 16
    %v1432 = vand.u32 %v1428, 65535
    %v1433 = vshrl.u32 %v1428, 16
    %v1434 = vmul.u32 %v1430, %v1432
    %v1435 = vmul.u32 %v1430, %v1433
    %v1436 = vmul.u32 %v1431, %v1432
    %v1437 = vmul.u32 %v1431, %v1433
    %v1438 = vshll.u32 %v1435, 16
    %v1439 = vshrl.u32 %v1435, 16
    %v1440 = vshll.u32 %v1436, 16
    %v1441 = vshrl.u32 %v1436, 16
    %vm1442 = vc.u32 %v1434, %v1438
    %v1443 = vsel %vm1442, 1, 0
    %v1444 = vadd.s32 %v1434, %v1438
    %v1445 = vadd.s32 %v1437, %v1443
    %vm1446 = vc.u32 %v1444, %v1440
    %v1447 = vsel %vm1446, 1, 0
    %v1448 = vadd.s32 %v1444, %v1440
    %v1449 = vadd.s32 %v1445, %v1447
    %v1450 = vadd.s32 %v1449, %v1439
    %v1451 = vadd.s32 %v1450, %v1441
    %v1452 = vand.u32 %v1429, 65535
    %v1453 = vshrl.u32 %v1429, 16
    %v1454 = vand.u32 %v1424, 65535
    %v1455 = vshrl.u32 %v1424, 16
    %v1456 = vmul.u32 %v1452, %v1454
    %v1457 = vmul.u32 %v1452, %v1455
    %v1458 = vmul.u32 %v1453, %v1454
    %v1459 = vmul.u32 %v1453, %v1455
    %v1460 = vshll.u32 %v1457, 16
    %v1461 = vshrl.u32 %v1457, 16
    %v1462 = vshll.u32 %v1458, 16
    %v1463 = vshrl.u32 %v1458, 16
    %vm1464 = vc.u32 %v1456, %v1460
    %v1465 = vsel %vm1464, 1, 0
    %v1466 = vadd.s32 %v1456, %v1460
    %v1467 = vadd.s32 %v1459, %v1465
    %vm1468 = vc.u32 %v1466, %v1462
    %v1469 = vsel %vm1468, 1, 0
    %v1470 = vadd.s32 %v1466, %v1462
    %v1471 = vadd.s32 %v1467, %v1469
    %v1472 = vadd.s32 %v1471, %v1461
    %v1473 = vadd.s32 %v1472, %v1463
    %v1474 = vmul.u32 %v1429, %v1420
    %v1475 = vadd.s32 %v1451, %v1470
    %vm1476 = vc.u32 %v1451, %v1470
    %v1477 = vadd.s32 %v1473, 1
    %v1478 = vsel %vm1476, %v1477, %v1473
    %v1479 = vadd.s32 %v1474, %v1478
    %v1480 = vadd.s32 %v1479, 536870912
    %v1481 = vshrl.u32 %v1480, 30
    %v1482 = vshll.u32 %v1481, 30
    %v1483 = vsub.s32 %v1479, %v1482
    %vm1484 = vcmp.lt.s32.totalorder %v1483, 0
    %v1485 = vsub.s32 0, %v1483
    %v1486 = vsel %vm1484, %v1485, %v1483
    %v1487 = vclz %v1486
    %v1488 = vsub.s32 %v1487, 2
    %vm1489 = vcmp.gt.s32.totalorder 0, %v1488
    %v1490 = vsel %vm1489, 0, %v1488
    %v1491 = vsub.s32 32, %v1490
    %v1492 = vshll.u32 %v1483, %v1490
    %v1493 = vshrl.u32 %v1475, %v1491
    %v1494 = vor.u32 %v1492, %v1493
    %v1495 = vsub.s32 4294967266, %v1490
    %v1496 = vadd.s32 %v1495, 127
    %v1497 = vshll.u32 %v1496, 23
    %v1498 = vor.u32 4788187, %v1497
    %v1499 = vand.u32 2147483647, %v1498
    %v1501 = vcvt.s32.f32 %v1494
    %v1502 = vmul.f32 %v1501, %v1499
    %v1503 = vxor.u32 %v1502, 2147483648
    %v1504 = vsel %vm1383, %v1503, %v1502
    %v1505 = vsub.s32 4, %v1481
    %v1506 = vsel %vm1383, %v1505, %v1481
    %v1507 = vsel %vm1382, %v1225, %v1504
    %v1508 = vsel %vm1382, 0, %v1506
    %v1509 = vmul.f32 %v1507, %v1507
    %v1510 = vmul.f32 %v1509, -0.001358992
    %v1511 = vadd.f32 %v1510, 0.041655596
    %v1512 = vmul.f32 %v1509, %v1511
    %v1513 = vadd.f32 %v1512, -0.4999988
    %v1514 = vmul.f32 %v1509, %v1513
    %v1515 = vadd.f32 1.0, %v1514
    %v1516 = vmul.f32 %v1507, %v1507
    %v1517 = vmul.f32 %v1516, -0.00019511016
    %v1518 = vadd.f32 %v1517, 0.008332121
    %v1519 = vmul.f32 %v1516, %v1518
    %v1520 = vadd.f32 %v1519, -0.16666654
    %v1521 = vmul.f32 %v1516, %v1520
    %v1522 = vadd.f32 %v1521, 1.0
    %v1523 = vmul.f32 %v1522, %v1507
    %vm1524 = vweird.f32 %v1225
    %v1525 = vand.u32 %v1508, 3
    %vm1526 = vcmp.lt.s32.totalorder %v1525, 2
    %vm1527 = vcmp.eq.s32.totalorder %v1525, 0
    %v1528 = vxor.u32 %v1523, 2147483648
    %v1529 = vsel %vm1527, %v1515, %v1528
    %vm1530 = vcmp.eq.s32.totalorder %v1525, 2
    %v1531 = vxor.u32 %v1515, 2147483648
    %v1532 = vsel %vm1530, %v1531, %v1523
    %v1533 = vsel %vm1526, %v1529, %v1532
    %v1534 = vsel %vm1524, nan, %v1533
    %v1535 = vperm.slane %v858, 6
    %v1536 = vmul.f32 %v1535, %v1380
    %v1537 = vmul.f32 %v1535, %v1534
    %v1538 = vand.u32 2147483647, %v1222
    %vm1539 = vcmp.le.f32.partialorder %v1538, 0.7853982
    %vm1540 = vcmp.lt.s32.totalorder %v1222, 0
    %v1541 = vand.u32 %v1222, 2139095040
    %v1542 = vshrl.u32 %v1541, 23
    %v1543 = vsub.s32 %v1542, 127
    %v1544 = vand.u32 2147483647, %v1222
    %v1545 = vand.u32 %v1544, 8388607
    %v1546 = vor.u32 %v1545, 8388608
    %v1547 = vsub.s32 0, %v1546
    %v1548 = vadd.s32 %v1543, 1
    %vm1549 = vcmp.gt.s32.totalorder %v1548, 0
    %v1550 = vsel %vm1549, %v1548, 0
    %v1551 = vshrl.u32 %v1550, 5
    %v1552 = vand.u32 %v1550, 31
    %v1553 = vsub.s32 32, %v1552
    %v1554 = vshrl.u32 683565275, %v1553
    %v1555 = vshll.u32 683565275, %v1552
    %v1556 = vshrl.u32 2475754826, %v1553
    %v1557 = vor.u32 %v1555, %v1556
    %v1558 = vshll.u32 2475754826, %v1552
    %v1559 = vshrl.u32 2131351028, %v1553
    %v1560 = vor.u32 %v1558, %v1559
    %v1561 = vshll.u32 2131351028, %v1552
    %v1562 = vshrl.u32 2102212464, %v1553
    %v1563 = vor.u32 %v1561, %v1562
    %v1564 = vshll.u32 2102212464, %v1552
    %v1565 = vshrl.u32 920167782, %v1553
    %v1566 = vor.u32 %v1564, %v1565
    %v1567 = vshll.u32 920167782, %v1552
    %v1568 = vshrl.u32 1326507024, %v1553
    %v1569 = vor.u32 %v1567, %v1568
    %vm1570 = vcmp.lt.s32.totalorder %v1551, 1
    %vm1571 = vcmp.lt.s32.totalorder %v1551, 2
    %vm1572 = vcmp.lt.s32.totalorder %v1551, 3
    %vm1573 = vcmp.lt.s32.totalorder %v1551, 4
    %v1574 = vsel %vm1570, %v1554, %v1557
    %v1575 = vsel %vm1573, %v1563, 2102212464
    %v1576 = vsel %vm1572, %v1560, %v1575
    %v1577 = vsel %vm1571, %v1574, %v1576
    %v1578 = vsel %vm1570, %v1557, %v1560
    %v1579 = vsel %vm1573, %v1566, 920167782
    %v1580 = vsel %vm1572, %v1563, %v1579
    %v1581 = vsel %vm1571, %v1578, %v1580
    %v1582 = vsel %vm1570, %v1560, %v1563
    %v1583 = vsel %vm1573, %v1569, 1326507024
    %v1584 = vsel %vm1572, %v1566, %v1583
    %v1585 = vsel %vm1571, %v1582, %v1584
    %v1586 = vshll.u32 %v1546, 8
    %v1587 = vand.u32 %v1586, 65535
    %v1588 = vshrl.u32 %v1586, 16
    %v1589 = vand.u32 %v1585, 65535
    %v1590 = vshrl.u32 %v1585, 16
    %v1591 = vmul.u32 %v1587, %v1589
    %v1592 = vmul.u32 %v1587, %v1590
    %v1593 = vmul.u32 %v1588, %v1589
    %v1594 = vmul.u32 %v1588, %v1590
    %v1595 = vshll.u32 %v1592, 16
    %v1596 = vshrl.u32 %v1592, 16
    %v1597 = vshll.u32 %v1593, 16
    %v1598 = vshrl.u32 %v1593, 16
    %vm1599 = vc.u32 %v1591, %v1595
    %v1600 = vsel %vm1599, 1, 0
    %v1601 = vadd.s32 %v1591, %v1595
    %v1602 = vadd.s32 %v1594, %v1600
    %vm1603 = vc.u32 %v1601, %v1597
    %v1604 = vsel %vm1603, 1, 0
    %v1605 = vadd.s32 %v1601, %v1597
    %v1606 = vadd.s32 %v1602, %v1604
    %v1607 = vadd.s32 %v1606, %v1596
    %v1608 = vadd.s32 %v1607, %v1598
    %v1609 = vand.u32 %v1586, 65535
    %v1610 = vshrl.u32 %v1586, 16
    %v1611 = vand.u32 %v1581, 65535
    %v1612 = vshrl.u32 %v1581, 16
    %v1613 = vmul.u32 %v1609, %v1611
    %v1614 = vmul.u32 %v1609, %v1612
    %v1615 = vmul.u32 %v1610, %v1611
    %v1616 = vmul.u32 %v1610, %v1612
    %v1617 = vshll.u32 %v1614, 16
    %v1618 = vshrl.u32 %v1614, 16
    %v1619 = vshll.u32 %v1615, 16
    %v1620 = vshrl.u32 %v1615, 16
    %vm1621 = vc.u32 %v1613, %v1617
    %v1622 = vsel %vm1621, 1, 0
    %v1623 = vadd.s32 %v1613, %v1617
    %v1624 = vadd.s32 %v1616, %v1622
    %vm1625 = vc.u32 %v1623, %v1619
    %v1626 = vsel %vm1625, 1, 0
    %v1627 = vadd.s32 %v1623, %v1619
    %v1628 = vadd.s32 %v1624, %v1626
    %v1629 = vadd.s32 %v1628, %v1618
    %v1630 = vadd.s32 %v1629, %v1620
    %v1631 = vmul.u32 %v1586, %v1577
    %v1632 = vadd.s32 %v1608, %v1627
    %vm1633 = vc.u32 %v1608, %v1627
    %v1634 = vadd.s32 %v1630, 1
    %v1635 = vsel %vm1633, %v1634, %v1630
    %v1636 = vadd.s32 %v1631, %v1635
    %v1637 = vadd.s32 %v1636, 536870912
    %v1638 = vshrl.u32 %v1637, 30
    %v1639 = vshll.u32 %v1638, 30
    %v1640 = vsub.s32 %v1636, %v1639
    %vm1641 = vcmp.lt.s32.totalorder %v1640, 0
    %v1642 = vsub.s32 0, %v1640
    %v1643 = vsel %vm1641, %v1642, %v1640
    %v1644 = vclz %v1643
    %v1645 = vsub.s32 %v1644, 2
    %vm1646 = vcmp.gt.s32.totalorder 0, %v1645
    %v1647 = vsel %vm1646, 0, %v1645
    %v1648 = vsub.s32 32, %v1647
    %v1649 = vshll.u32 %v1640, %v1647
    %v1650 = vshrl.u32 %v1632, %v1648
    %v1651 = vor.u32 %v1649, %v1650
    %v1652 = vsub.s32 4294967266, %v1647
    %v1653 = vadd.s32 %v1652, 127
    %v1654 = vshll.u32 %v1653, 23
    %v1655 = vor.u32 4788187, %v1654
    %v1656 = vand.u32 2147483647, %v1655
    %v1658 = vcvt.s32.f32 %v1651
    %v1659 = vmul.f32 %v1658, %v1656
    %v1660 = vxor.u32 %v1659, 2147483648
    %v1661 = vsel %vm1540, %v1660, %v1659
    %v1662 = vsub.s32 4, %v1638
    %v1663 = vsel %vm1540, %v1662, %v1638
    %v1664 = vsel %vm1539, %v1222, %v1661
    %v1665 = vsel %vm1539, 0, %v1663
    %v1666 = vmul.f32 %v1664, %v1664
    %v1667 = vmul.f32 %v1666, -0.001358992
    %v1668 = vadd.f32 %v1667, 0.041655596
    %v1669 = vmul.f32 %v1666, %v1668
    %v1670 = vadd.f32 %v1669, -0.4999988
    %v1671 = vmul.f32 %v1666, %v1670
    %v1672 = vadd.f32 1.0, %v1671
    %v1673 = vmul.f32 %v1664, %v1664
    %v1674 = vmul.f32 %v1673, -0.00019511016
    %v1675 = vadd.f32 %v1674, 0.008332121
    %v1676 = vmul.f32 %v1673, %v1675
    %v1677 = vadd.f32 %v1676, -0.16666654
    %v1678 = vmul.f32 %v1673, %v1677
    %v1679 = vadd.f32 %v1678, 1.0
    %v1680 = vmul.f32 %v1679, %v1664
    %vm1681 = vweird.f32 %v1222
    %v1682 = vadd.s32 %v1665, 3
    %v1683 = vand.u32 %v1682, 3
    %vm1684 = vcmp.lt.s32.totalorder %v1683, 2
    %vm1685 = vcmp.eq.s32.totalorder %v1683, 0
    %v1686 = vxor.u32 %v1680, 2147483648
    %v1687 = vsel %vm1685, %v1672, %v1686
    %vm1688 = vcmp.eq.s32.totalorder %v1683, 2
    %v1689 = vxor.u32 %v1672, 2147483648
    %v1690 = vsel %vm1688, %v1689, %v1680
    %v1691 = vsel %vm1684, %v1687, %v1690
    %v1692 = vsel %vm1681, nan, %v1691
    %v1693 = vand.u32 2147483647, %v1225
    %vm1694 = vcmp.le.f32.partialorder %v1693, 0.7853982
    %vm1695 = vcmp.lt.s32.totalorder %v1225, 0
    %v1696 = vand.u32 %v1225, 2139095040
    %v1697 = vshrl.u32 %v1696, 23
    %v1698 = vsub.s32 %v1697, 127
    %v1699 = vand.u32 2147483647, %v1225
    %v1700 = vand.u32 %v1699, 8388607
    %v1701 = vor.u32 %v1700, 8388608
    %v1702 = vsub.s32 0, %v1701
    %v1703 = vadd.s32 %v1698, 1
    %vm1704 = vcmp.gt.s32.totalorder %v1703, 0
    %v1705 = vsel %vm1704, %v1703, 0
    %v1706 = vshrl.u32 %v1705, 5
    %v1707 = vand.u32 %v1705, 31
    %v1708 = vsub.s32 32, %v1707
    %v1709 = vshrl.u32 683565275, %v1708
    %v1710 = vshll.u32 683565275, %v1707
    %v1711 = vshrl.u32 2475754826, %v1708
    %v1712 = vor.u32 %v1710, %v1711
    %v1713 = vshll.u32 2475754826, %v1707
    %v1714 = vshrl.u32 2131351028, %v1708
    %v1715 = vor.u32 %v1713, %v1714
    %v1716 = vshll.u32 2131351028, %v1707
    %v1717 = vshrl.u32 2102212464, %v1708
    %v1718 = vor.u32 %v1716, %v1717
    %v1719 = vshll.u32 2102212464, %v1707
    %v1720 = vshrl.u32 920167782, %v1708
    %v1721 = vor.u32 %v1719, %v1720
    %v1722 = vshll.u32 920167782, %v1707
    %v1723 = vshrl.u32 1326507024, %v1708
    %v1724 = vor.u32 %v1722, %v1723
    %vm1725 = vcmp.lt.s32.totalorder %v1706, 1
    %vm1726 = vcmp.lt.s32.totalorder %v1706, 2
    %vm1727 = vcmp.lt.s32.totalorder %v1706, 3
    %vm1728 = vcmp.lt.s32.totalorder %v1706, 4
    %v1729 = vsel %vm1725, %v1709, %v1712
    %v1730 = vsel %vm1728, %v1718, 2102212464
    %v1731 = vsel %vm1727, %v1715, %v1730
    %v1732 = vsel %vm1726, %v1729, %v1731
    %v1733 = vsel %vm1725, %v1712, %v1715
    %v1734 = vsel %vm1728, %v1721, 920167782
    %v1735 = vsel %vm1727, %v1718, %v1734
    %v1736 = vsel %vm1726, %v1733, %v1735
    %v1737 = vsel %vm1725, %v1715, %v1718
    %v1738 = vsel %vm1728, %v1724, 1326507024
    %v1739 = vsel %vm1727, %v1721, %v1738
    %v1740 = vsel %vm1726, %v1737, %v1739
    %v1741 = vshll.u32 %v1701, 8
    %v1742 = vand.u32 %v1741, 65535
    %v1743 = vshrl.u32 %v1741, 16
    %v1744 = vand.u32 %v1740, 65535
    %v1745 = vshrl.u32 %v1740, 16
    %v1746 = vmul.u32 %v1742, %v1744
    %v1747 = vmul.u32 %v1742, %v1745
    %v1748 = vmul.u32 %v1743, %v1744
    %v1749 = vmul.u32 %v1743, %v1745
    %v1750 = vshll.u32 %v1747, 16
    %v1751 = vshrl.u32 %v1747, 16
    %v1752 = vshll.u32 %v1748, 16
    %v1753 = vshrl.u32 %v1748, 16
    %vm1754 = vc.u32 %v1746, %v1750
    %v1755 = vsel %vm1754, 1, 0
    %v1756 = vadd.s32 %v1746, %v1750
    %v1757 = vadd.s32 %v1749, %v1755
    %vm1758 = vc.u32 %v1756, %v1752
    %v1759 = vsel %vm1758, 1, 0
    %v1760 = vadd.s32 %v1756, %v1752
    %v1761 = vadd.s32 %v1757, %v1759
    %v1762 = vadd.s32 %v1761, %v1751
    %v1763 = vadd.s32 %v1762, %v1753
    %v1764 = vand.u32 %v1741, 65535
    %v1765 = vshrl.u32 %v1741, 16
    %v1766 = vand.u32 %v1736, 65535
    %v1767 = vshrl.u32 %v1736, 16
    %v1768 = vmul.u32 %v1764, %v1766
    %v1769 = vmul.u32 %v1764, %v1767
    %v1770 = vmul.u32 %v1765, %v1766
    %v1771 = vmul.u32 %v1765, %v1767
    %v1772 = vshll.u32 %v1769, 16
    %v1773 = vshrl.u32 %v1769, 16
    %v1774 = vshll.u32 %v1770, 16
    %v1775 = vshrl.u32 %v1770, 16
    %vm1776 = vc.u32 %v1768, %v1772
    %v1777 = vsel %vm1776, 1, 0
    %v1778 = vadd.s32 %v1768, %v1772
    %v1779 = vadd.s32 %v1771, %v1777
    %vm1780 = vc.u32 %v1778, %v1774
    %v1781 = vsel %vm1780, 1, 0
    %v1782 = vadd.s32 %v1778, %v1774
    %v1783 = vadd.s32 %v1779, %v1781
    %v1784 = vadd.s32 %v1783, %v1773
    %v1785 = vadd.s32 %v1784, %v1775
    %v1786 = vmul.u32 %v1741, %v1732
    %v1787 = vadd.s32 %v1763, %v1782
    %vm1788 = vc.u32 %v1763, %v1782
    %v1789 = vadd.s32 %v1785, 1
    %v1790 = vsel %vm1788, %v1789, %v1785
    %v1791 = vadd.s32 %v1786, %v1790
    %v1792 = vadd.s32 %v1791, 536870912
    %v1793 = vshrl.u32 %v1792, 30
    %v1794 = vshll.u32 %v1793, 30
    %v1795 = vsub.s32 %v1791, %v1794
    %vm1796 = vcmp.lt.s32.totalorder %v1795, 0
    %v1797 = vsub.s32 0, %v1795
    %v1798 = vsel %vm1796, %v1797, %v1795
    %v1799 = vclz %v1798
    %v1800 = vsub.s32 %v1799, 2
    %vm1801 = vcmp.gt.s32.totalorder 0, %v1800
    %v1802 = vsel %vm1801, 0, %v1800
    %v1803 = vsub.s32 32, %v1802
    %v1804 = vshll.u32 %v1795, %v1802
    %v1805 = vshrl.u32 %v1787, %v1803
    %v1806 = vor.u32 %v1804, %v1805
    %v1807 = vsub.s32 4294967266, %v1802
    %v1808 = vadd.s32 %v1807, 127
    %v1809 = vshll.u32 %v1808, 23
    %v1810 = vor.u32 4788187, %v1809
    %v1811 = vand.u32 2147483647, %v1810
    %v1813 = vcvt.s32.f32 %v1806
    %v1814 = vmul.f32 %v1813, %v1811
    %v1815 = vxor.u32 %v1814, 2147483648
    %v1816 = vsel %vm1695, %v1815, %v1814
    %v1817 = vsub.s32 4, %v1793
    %v1818 = vsel %vm1695, %v1817, %v1793
    %v1819 = vsel %vm1694, %v1225, %v1816
    %v1820 = vsel %vm1694, 0, %v1818
    %v1821 = vmul.f32 %v1819, %v1819
    %v1822 = vmul.f32 %v1821, -0.001358992
    %v1823 = vadd.f32 %v1822, 0.041655596
    %v1824 = vmul.f32 %v1821, %v1823
    %v1825 = vadd.f32 %v1824, -0.4999988
    %v1826 = vmul.f32 %v1821, %v1825
    %v1827 = vadd.f32 1.0, %v1826
    %v1828 = vmul.f32 %v1819, %v1819
    %v1829 = vmul.f32 %v1828, -0.00019511016
    %v1830 = vadd.f32 %v1829, 0.008332121
    %v1831 = vmul.f32 %v1828, %v1830
    %v1832 = vadd.f32 %v1831, -0.16666654
    %v1833 = vmul.f32 %v1828, %v1832
    %v1834 = vadd.f32 %v1833, 1.0
    %v1835 = vmul.f32 %v1834, %v1819
    %vm1836 = vweird.f32 %v1225
    %v1837 = vadd.s32 %v1820, 3
    %v1838 = vand.u32 %v1837, 3
    %vm1839 = vcmp.lt.s32.totalorder %v1838, 2
    %vm1840 = vcmp.eq.s32.totalorder %v1838, 0
    %v1841 = vxor.u32 %v1835, 2147483648
    %v1842 = vsel %vm1840, %v1827, %v1841
    %vm1843 = vcmp.eq.s32.totalorder %v1838, 2
    %v1844 = vxor.u32 %v1827, 2147483648
    %v1845 = vsel %vm1843, %v1844, %v1835
    %v1846 = vsel %vm1839, %v1842, %v1845
    %v1847 = vsel %vm1836, nan, %v1846
    %v1848 = vperm.slane %v858, 7
    %v1849 = vmul.f32 %v1848, %v1692
    %v1850 = vmul.f32 %v1848, %v1847
    %v1851 = vsub.f32 %v1536, %v1849
    %v1852 = vsub.f32 %v1537, %v1850
    %v1853 = vadd.f32 %v1851, %v186
    %v1854 = vadd.f32 %v1852, %v187
    %v1855 = vld [vmem:[#allocation5 + $0x120] sm:$0xf]
    %v1856 = vld [vmem:[#allocation5 + $0x128] sm:$0xff]
    %v1857 = vld [vmem:[#allocation5 + $0x130] sm:$0xff]
    %v1858 = vld [vmem:[#allocation5 + $0x138] sm:$0xff]
    %v1859 = vld [vmem:[#allocation5 + $0x140] sm:$0xff]
    %v1860 = vld [vmem:[#allocation5 + $0x148] sm:$0xff]
    %v1861 = vld [vmem:[#allocation5 + $0x150] sm:$0xff]
    %v1862 = vld [vmem:[#allocation5 + $0x158] sm:$0xff]
    %v1863 = vld [vmem:[#allocation5 + $0x160] sm:$0xff]
    %v1864 = vld [vmem:[#allocation5 + $0x168] sm:$0xff]
    %v1865 = vld [vmem:[#allocation5 + $0x170] sm:$0xff]
    %v1866 = vld [vmem:[#allocation5 + $0x178] sm:$0xff]
    %v1867 = vld [vmem:[#allocation5 + $0x180] sm:$0xff]
    %v1868 = vld [vmem:[#allocation5 + $0x188] sm:$0xff]
    %v1869 = vld [vmem:[#allocation5 + $0x190] sm:$0xff]
    %v1870 = vld [vmem:[#allocation5 + $0x198] sm:$0xff]
    %v1871 = vld [vmem:[#allocation5 + $0x1a0] sm:$0xff]
    %v1873 = vsel %vm1124, %v1855, 0
    %1875 = vmatpush.msra.mxu0 0.0
    %1876 = vmatpush.msra.mxu0 0.0
    %1877 = vmatpush.msra.mxu0 0.0
    %1878 = vmatpush.msra.mxu0 0.0
    %1879 = vmatpush.msra.mxu0 0.0
    %1880 = vmatpush.msra.mxu0 0.0
    %1881 = vmatpush.msra.mxu0 0.0
    %1882 = vmatpush.msra.mxu0 0.0
    %1883 = vmatpush.msra.mxu0 0.0
    %1884 = vmatpush.msra.mxu0 0.0
    %1885 = vmatpush.msra.mxu0 0.0
    %1886 = vmatpush.msra.mxu0 0.0
    %1887 = vmatpush.msra.mxu0 0.0
    %1888 = vmatpush.msra.mxu0 0.0
    %1889 = vmatpush.msra.mxu0 %v1854
    %1890 = vmatpush.msra.mxu0 %v1853
    %1891 = vmatmul.f32.gmra.mxu0 %v1873
    %v1892 = vpop.f32.mrf.mxu0
    %v1893 = vadd.f32 0.0, %v1892
    %1894 = vdwg.mxu0
    %1895 = vrot.lane.b32.xlu0 %v1855, 112
    %v1896 = vpop.permute.xlu0 %1895
    %v1897 = vsel %vm1124, %v1896, 0
    %1899 = vmatpush.msra.mxu0 0.0
    %1900 = vmatpush.msra.mxu0 0.0
    %1901 = vmatpush.msra.mxu0 0.0
    %1902 = vmatpush.msra.mxu0 0.0
    %1903 = vmatpush.msra.mxu0 0.0
    %1904 = vmatpush.msra.mxu0 0.0
    %1905 = vmatpush.msra.mxu0 0.0
    %1906 = vmatpush.msra.mxu0 0.0
    %1907 = vmatpush.msra.mxu0 0.0
    %1908 = vmatpush.msra.mxu0 0.0
    %1909 = vmatpush.msra.mxu0 0.0
    %1910 = vmatpush.msra.mxu0 0.0
    %1911 = vmatpush.msra.mxu0 0.0
    %1912 = vmatpush.msra.mxu0 0.0
    %1913 = vmatpush.msra.mxu0 %v1854
    %1914 = vmatpush.msra.mxu0 %v1853
    %1915 = vmatmul.f32.gmra.mxu0 %v1897
    %v1916 = vpop.f32.mrf.mxu0
    %v1917 = vadd.f32 0.0, %v1916
    %1918 = vdwg.mxu0
    %v1920 = vsel %vm188, %v1917, 0
    %1922 = vmatpush.msra.mxu0 0.0
    %1923 = vmatpush.msra.mxu0 0.0
    %1924 = vmatpush.msra.mxu0 0.0
    %1925 = vmatpush.msra.mxu0 0.0
    %1926 = vmatpush.msra.mxu0 0.0
    %1927 = vmatpush.msra.mxu0 0.0
    %1928 = vmatpush.msra.mxu0 0.0
    %1929 = vmatpush.msra.mxu0 0.0
    %1930 = vmatpush.msra.mxu0 0.0
    %1931 = vmatpush.msra.mxu0 0.0
    %1932 = vmatpush.msra.mxu0 0.0
    %1933 = vmatpush.msra.mxu0 0.0
    %1934 = vmatpush.msra.mxu0 %v1863
    %1935 = vmatpush.msra.mxu0 %v1862
    %1936 = vmatpush.msra.mxu0 %v1861
    %1937 = vmatpush.msra.mxu0 %v1860
    %1938 = vmatmul.f32.gmra.mxu0 %v1920
    %v1939 = vpop.f32.mrf.mxu0
    %v1940 = vadd.f32 0.0, %v1939
    %1941 = vdwg.mxu0
    %v1943 = vsel %vm188, %v1893, 0
    %1945 = vmatpush.msra.mxu0 0.0
    %1946 = vmatpush.msra.mxu0 0.0
    %1947 = vmatpush.msra.mxu0 0.0
    %1948 = vmatpush.msra.mxu0 0.0
    %1949 = vmatpush.msra.mxu0 0.0
    %1950 = vmatpush.msra.mxu0 0.0
    %1951 = vmatpush.msra.mxu0 0.0
    %1952 = vmatpush.msra.mxu0 0.0
    %1953 = vmatpush.msra.mxu0 0.0
    %1954 = vmatpush.msra.mxu0 0.0
    %1955 = vmatpush.msra.mxu0 0.0
    %1956 = vmatpush.msra.mxu0 0.0
    %1957 = vmatpush.msra.mxu0 %v1859
    %1958 = vmatpush.msra.mxu0 %v1858
    %1959 = vmatpush.msra.mxu0 %v1857
    %1960 = vmatpush.msra.mxu0 %v1856
    %1961 = vmatmul.f32.gmra.mxu0 %v1943
    %v1962 = vpop.f32.mrf.mxu0
    %v1963 = vadd.f32 %v1940, %v1962
    %1964 = vdwg.mxu0
    %1965 = vrot.lane.b32.xlu0 %v1855, 96
    %v1966 = vpop.permute.xlu0 %1965
    %v1967 = vsel %vm1124, %v1966, 0
    %1969 = vmatpush.msra.mxu0 0.0
    %1970 = vmatpush.msra.mxu0 0.0
    %1971 = vmatpush.msra.mxu0 0.0
    %1972 = vmatpush.msra.mxu0 0.0
    %1973 = vmatpush.msra.mxu0 0.0
    %1974 = vmatpush.msra.mxu0 0.0
    %1975 = vmatpush.msra.mxu0 0.0
    %1976 = vmatpush.msra.mxu0 0.0
    %1977 = vmatpush.msra.mxu0 0.0
    %1978 = vmatpush.msra.mxu0 0.0
    %1979 = vmatpush.msra.mxu0 0.0
    %1980 = vmatpush.msra.mxu0 0.0
    %1981 = vmatpush.msra.mxu0 0.0
    %1982 = vmatpush.msra.mxu0 0.0
    %1983 = vmatpush.msra.mxu0 %v1854
    %1984 = vmatpush.msra.mxu0 %v1853
    %1985 = vmatmul.f32.gmra.mxu0 %v1967
    %v1986 = vpop.f32.mrf.mxu0
    %v1987 = vadd.f32 0.0, %v1986
    %1988 = vdwg.mxu0
    %v1990 = vsel %vm188, %v1987, 0
    %1992 = vmatpush.msra.mxu0 0.0
    %1993 = vmatpush.msra.mxu0 0.0
    %1994 = vmatpush.msra.mxu0 0.0
    %1995 = vmatpush.msra.mxu0 0.0
    %1996 = vmatpush.msra.mxu0 0.0
    %1997 = vmatpush.msra.mxu0 0.0
    %1998 = vmatpush.msra.mxu0 0.0
    %1999 = vmatpush.msra.mxu0 0.0
    %2000 = vmatpush.msra.mxu0 0.0
    %2001 = vmatpush.msra.mxu0 0.0
    %2002 = vmatpush.msra.mxu0 0.0
    %2003 = vmatpush.msra.mxu0 0.0
    %2004 = vmatpush.msra.mxu0 %v1867
    %2005 = vmatpush.msra.mxu0 %v1866
    %2006 = vmatpush.msra.mxu0 %v1865
    %2007 = vmatpush.msra.mxu0 %v1864
    %2008 = vmatmul.f32.gmra.mxu0 %v1990
    %v2009 = vpop.f32.mrf.mxu0
    %v2010 = vadd.f32 0.0, %v2009
    %2011 = vdwg.mxu0
    %v2012 = vadd.f32 %v1963, %v2010
    %2013 = vrot.lane.b32.xlu0 %v1855, 80
    %v2014 = vpop.permute.xlu0 %2013
    %v2015 = vsel %vm1124, %v2014, 0
    %2017 = vmatpush.msra.mxu0 0.0
    %2018 = vmatpush.msra.mxu0 0.0
    %2019 = vmatpush.msra.mxu0 0.0
    %2020 = vmatpush.msra.mxu0 0.0
    %2021 = vmatpush.msra.mxu0 0.0
    %2022 = vmatpush.msra.mxu0 0.0
    %2023 = vmatpush.msra.mxu0 0.0
    %2024 = vmatpush.msra.mxu0 0.0
    %2025 = vmatpush.msra.mxu0 0.0
    %2026 = vmatpush.msra.mxu0 0.0
    %2027 = vmatpush.msra.mxu0 0.0
    %2028 = vmatpush.msra.mxu0 0.0
    %2029 = vmatpush.msra.mxu0 0.0
    %2030 = vmatpush.msra.mxu0 0.0
    %2031 = vmatpush.msra.mxu0 %v1854
    %2032 = vmatpush.msra.mxu0 %v1853
    %2033 = vmatmul.f32.gmra.mxu0 %v2015
    %v2034 = vpop.f32.mrf.mxu0
    %v2035 = vadd.f32 0.0, %v2034
    %2036 = vdwg.mxu0
    %v2038 = vsel %vm188, %v2035, 0
    %2040 = vmatpush.msra.mxu0 0.0
    %2041 = vmatpush.msra.mxu0 0.0
    %2042 = vmatpush.msra.mxu0 0.0
    %2043 = vmatpush.msra.mxu0 0.0
    %2044 = vmatpush.msra.mxu0 0.0
    %2045 = vmatpush.msra.mxu0 0.0
    %2046 = vmatpush.msra.mxu0 0.0
    %2047 = vmatpush.msra.mxu0 0.0
    %2048 = vmatpush.msra.mxu0 0.0
    %2049 = vmatpush.msra.mxu0 0.0
    %2050 = vmatpush.msra.mxu0 0.0
    %2051 = vmatpush.msra.mxu0 0.0
    %2052 = vmatpush.msra.mxu0 %v1871
    %2053 = vmatpush.msra.mxu0 %v1870
    %2054 = vmatpush.msra.mxu0 %v1869
    %2055 = vmatpush.msra.mxu0 %v1868
    %2056 = vmatmul.f32.gmra.mxu0 %v2038
    %v2057 = vpop.f32.mrf.mxu0
    %v2058 = vadd.f32 0.0, %v2057
    %2059 = vdwg.mxu0
    %v2060 = vadd.f32 %v2012, %v2058
    %2061 = vst [vmem:[#allocation7] sm:$0xf] %v2060
    // Predicated region
    $region18: #{tpu_custom_call.1} parent=1 // pred_check
      _
    $region19: #{tpu_custom_call.1} parent=1 // pred_check_branch
      %2063 = sbr.rel (0) target = $region21
    $region20: #{tpu_custom_call.1} parent=1 // pred_region
      %2065 = vsyncadd [#allocation4], 0
      %s2067 = sshll.u32 [#allocation7], 4
      %s2068 = int_to_ptr.vmem [resolvable:$true] %s2067
      %s2069 = sshll.u32 %s2, 4
      %s2070 = int_to_ptr.hbm [resolvable:$true] %s2069
      %2072 = dma.vmem_to_hbm [thread:$0]  %s2068, 64, %s2070, [#allocation4]
    $region21: #{tpu_custom_call.1} parent=1 // pred_fallthru
      _
    // Predicated region
    $region22: #{tpu_custom_call.1} parent=1 // pred_check
      _
    $region23: #{tpu_custom_call.1} parent=1 // pred_check_branch
      %2074 = sbr.rel (0) target = $region25
    $region24: #{tpu_custom_call.1} parent=1 // pred_region
      %2076 = dma.done [#allocation4], 64
    $region25: #{tpu_custom_call.1} parent=1 // pred_fallthru
      _
    %2077 = vsyncpa [#allocation3], 1
    %2078 = vsyncpa [#allocation6], 1
    %2079 = vsyncpa [#allocation4], 1

</llo_original>
